<compile_context>
chip_gen: v7x
topology: tpu7x:2x2x1
jax: 0.10.0
libtpu: 0.0.40
codegen_flags: <defaults>
</compile_context>

<pallas_src>
import functools
import math

import jax
import jax.numpy as jnp
from jax.experimental import pallas as pl
from jax.experimental.pallas import tpu as pltpu


def _split_heads(x2d, num_heads, head_dim):
    """(T, H*hd) -> (H, T, hd)."""
    t = x2d.shape[0]
    return jnp.transpose(x2d.reshape(t, num_heads, head_dim), (1, 0, 2))


def _mha_flash_kernel(xq_ref, xkv_ref, wq_ref, wkv_ref, wo_ref, bo_ref,
                      o_ref,
                      q_scr, acc_scr, m_scr, l_scr,
                      *, num_heads, head_dim):
    """One (batch, q-tile, kv-tile) grid step.

    xq_ref : (1, TQ, Dp)    current q tile of x
    xkv_ref: (1, TK, Dp)    current kv tile of x
    wq_ref : (Dp, E)        Q projection weight (pre-scaled by 1/sqrt(hd))
    wkv_ref: (Dp, 2E)       concatenated [K | V] projection weights
    wo_ref : (E, Dp)        output projection (transposed), bo_ref: (1, Dp)
    o_ref  : (1, TQ, Dp)
    q_scr  : (H, TQ, hd) f32   cached per-head Q for this q tile
    acc_scr: (H, TQ, hd) f32   online-softmax accumulator
    m_scr/l_scr: (H, TQ, 1) f32  running max / running sum
    """
    ki = pl.program_id(2)
    nk = pl.num_programs(2)
    embed_dim = num_heads * head_dim

    @pl.when(ki == 0)
    def _init():
        xq = xq_ref[0]                                               # (TQ, Dp)
        q_flat = jnp.dot(xq, wq_ref[...],
                         preferred_element_type=jnp.float32)         # (TQ, E), pre-scaled
        q_scr[...] = _split_heads(q_flat, num_heads, head_dim)       # (H, TQ, hd)
        m_scr[...] = jnp.full_like(m_scr, -jnp.inf)
        l_scr[...] = jnp.zeros_like(l_scr)
        acc_scr[...] = jnp.zeros_like(acc_scr)

    # K / V projections for this kv tile: one lane-dense (TK, Dp) x (Dp, 2E) matmul.
    xkv = xkv_ref[0]                                                 # (TK, Dp)
    kv_flat = jnp.dot(xkv, wkv_ref[...],
                      preferred_element_type=jnp.float32)            # (TK, 2E)
    k = _split_heads(kv_flat[:, :embed_dim], num_heads, head_dim)    # (H, TK, hd)
    v = _split_heads(kv_flat[:, embed_dim:], num_heads, head_dim)    # (H, TK, hd)

    q = q_scr[...]                                                   # (H, TQ, hd)
    # Batched over heads; contraction on the last dim of both (no explicit .T).
    s = jnp.einsum('hqd,hkd->hqk', q, k,
                   preferred_element_type=jnp.float32)               # (H, TQ, TK)

    m_prev = m_scr[...]                                              # (H, TQ, 1)
    m_new = jnp.maximum(m_prev, jnp.max(s, axis=-1, keepdims=True))
    alpha = jnp.exp(m_prev - m_new)
    p = jnp.exp(s - m_new)                                           # (H, TQ, TK)
    l_scr[...] = alpha * l_scr[...] + jnp.sum(p, axis=-1, keepdims=True)
    pv = jnp.einsum('hqk,hkd->hqd', p.astype(v.dtype), v,
                    preferred_element_type=jnp.float32)              # (H, TQ, hd)
    acc_scr[...] = alpha * acc_scr[...] + pv
    m_scr[...] = m_new

    @pl.when(ki == nk - 1)
    def _finalize():
        inv_l = pl.reciprocal(l_scr[...], approx=True)               # (H, TQ, 1)
        out_heads = acc_scr[...] * inv_l                             # (H, TQ, hd)
        tq = out_heads.shape[1]
        values = jnp.transpose(out_heads, (1, 0, 2)).reshape(
            tq, num_heads * head_dim)                                # (TQ, E) lane-dense
        o = jnp.dot(values, wo_ref[...],
                    preferred_element_type=jnp.float32) + bo_ref[...]
        o_ref[0] = o.astype(o_ref.dtype)


def _pick_seq_tile(length, target):
    """Largest tile <= target that divides `length` and is a multiple of 8."""
    if length <= target:
        return length
    for t in range(target, 0, -8):
        if t % 8 == 0 and length % t == 0:
            return t
    return length   # fallback: no nice divisor -> single full-length tile


def multihead_attention(x, w_qkv, w_o, b_o, *, num_heads, q_tile=256, kv_tile=256):
    """Pallas wrapper reproducing MultiheadAttention.forward(x, mask=None).

    x:      (B, L, D_in)
    w_qkv:  (3*E, D_in)   PyTorch Linear weight layout (out_features, in_features)
    w_o:    (D_in, E)
    b_o:    (D_in,)
    """
    B, L, d_in = x.shape
    three_e, d_in2 = w_qkv.shape
    assert d_in == d_in2, "input dim mismatch"
    embed_dim = three_e // 3
    assert embed_dim % num_heads == 0
    head_dim = embed_dim // num_heads

    # Reproduce the module's interleaved (..., H, hd, 3) qkv packing on the weight
    # side: qkv-output column index = (h*hd + i)*3 + t  with t in {q,k,v}.
    w_split = w_qkv.reshape(num_heads, head_dim, 3, d_in)            # (H, hd, 3, D_in)

    def _flat(t):
        # (H, hd, D_in) -> (D_in, E) with E-column = h*hd + i
        return jnp.transpose(w_split[:, :, t, :], (2, 0, 1)).reshape(d_in, embed_dim)

    w_q = _flat(0) * (1.0 / math.sqrt(head_dim))      # fold softmax scale into W_q
    w_k = _flat(1)
    w_v = _flat(2)
    w_kv = jnp.concatenate([w_k, w_v], axis=1)        # (D_in, 2E) — one hot-loop matmul
    w_o_t = w_o.T                                     # (E, D_in)

    # Pad feature dim to a multiple of 128 for lane-dense blocks / stores.
    # Zero-padded weight rows / output cols are exact; extra cols sliced off below.
    d_pad = ((d_in + 127) // 128) * 128
    if d_pad != d_in:
        pad = d_pad - d_in
        x = jnp.pad(x, ((0, 0), (0, 0), (0, pad)))
        w_q = jnp.pad(w_q, ((0, pad), (0, 0)))
        w_kv = jnp.pad(w_kv, ((0, pad), (0, 0)))
        w_o_t = jnp.pad(w_o_t, ((0, 0), (0, pad)))
        b_o = jnp.pad(b_o, ((0, pad),))
    b_o2 = b_o.reshape(1, d_pad)

    tq = _pick_seq_tile(L, q_tile)
    tk = _pick_seq_tile(L, kv_tile)
    nq = L // tq
    nk = L // tk

    kernel = functools.partial(_mha_flash_kernel,
                               num_heads=num_heads, head_dim=head_dim)

    # Explicit VMEM budget: weights + double-buffered x/out blocks + scratch +
    # transient per-step intermediates, with headroom.  Clamped to the v7x
    # physical VMEM size so the same wrapper is safe on v5e/v6e/v7x.
    f32 = 4
    dt = jnp.dtype(x.dtype).itemsize
    est = (
        2 * (3 * d_pad * embed_dim + embed_dim * d_pad + d_pad) * dt      # weights
        + 2 * (tq + tk + tq) * d_pad * dt                                 # x_q / x_kv / out
        + (2 * num_heads * tq * head_dim + 2 * num_heads * tq * 128) * f32  # scratch
        + 2 * (num_heads * tq * tk + 2 * num_heads * tq * head_dim) * f32   # live s/p/pv
    )
    vmem_limit = int(min(max(2 * est, 32 * 1024 * 1024), 64 * 1024 * 1024))

    out = pl.pallas_call(
        kernel,
        out_shape=jax.ShapeDtypeStruct((B, L, d_pad), x.dtype),
        grid_spec=pltpu.PrefetchScalarGridSpec(
            num_scalar_prefetch=0,
            grid=(B, nq, nk),
            in_specs=[
                pl.BlockSpec((1, tq, d_pad), lambda b, qi, ki: (b, qi, 0)),    # x (q view)
                pl.BlockSpec((1, tk, d_pad), lambda b, qi, ki: (b, ki, 0)),    # x (kv view)
                pl.BlockSpec((d_pad, embed_dim), lambda b, qi, ki: (0, 0)),    # W_q (scaled)
                pl.BlockSpec((d_pad, 2 * embed_dim), lambda b, qi, ki: (0, 0)),  # [W_k | W_v]
                pl.BlockSpec((embed_dim, d_pad), lambda b, qi, ki: (0, 0)),    # W_o^T
                pl.BlockSpec((1, d_pad), lambda b, qi, ki: (0, 0)),            # b_o
            ],
            out_specs=pl.BlockSpec((1, tq, d_pad), lambda b, qi, ki: (b, qi, 0)),
            scratch_shapes=[
                pltpu.VMEM((num_heads, tq, head_dim), jnp.float32),   # q cache
                pltpu.VMEM((num_heads, tq, head_dim), jnp.float32),   # accumulator
                pltpu.VMEM((num_heads, tq, 1), jnp.float32),          # running max
                pltpu.VMEM((num_heads, tq, 1), jnp.float32),          # running sum
            ],
        ),
        compiler_params=pltpu.CompilerParams(
            dimension_semantics=("parallel", "parallel", "arbitrary"),
            vmem_limit_bytes=vmem_limit,
        ),
    )(x, x, w_q, w_kv, w_o_t, b_o2)

    return out[..., :d_in]


def reference_mha(x, w_qkv, w_o, b_o, *, num_heads):
    """Pure-JAX replica of the PyTorch forward (for verification)."""
    B, L, d_in = x.shape
    embed_dim = w_qkv.shape[0] // 3
    head_dim = embed_dim // num_heads
    qkv = x @ w_qkv.T                                            # (B, L, 3E)
    qkv = qkv.reshape(B, L, num_heads, head_dim, 3)
    qkv = jnp.einsum('blhit->bhlit', qkv)
    q, k, v = qkv[..., 0], qkv[..., 1], qkv[..., 2]
    s = jnp.einsum('bhld,bhmd->bhlm', q, k) / math.sqrt(head_dim)
    p = jax.nn.softmax(s, axis=-1)
    vals = jnp.einsum('bhlm,bhmd->bhld', p, v)
    vals = jnp.einsum('bhld->blhd', vals).reshape(B, L, embed_dim)
    return vals @ w_o.T + b_o


if __name__ == "__main__":
    # Small shapes consistent with the module.
    B, L = 2, 8
    input_dim, embed_dim, num_heads = 32, 32, 4

    key = jax.random.PRNGKey(0)
    k_x, k_qkv, k_o = jax.random.split(key, 3)

    x = jax.random.normal(k_x, (B, L, input_dim), dtype=jnp.float32)

    # Deterministic Xavier-uniform init (mirrors nn.init.xavier_uniform_).
    bound_qkv = math.sqrt(6.0 / (input_dim + 3 * embed_dim))
    w_qkv = jax.random.uniform(k_qkv, (3 * embed_dim, input_dim),
                               minval=-bound_qkv, maxval=bound_qkv,
                               dtype=jnp.float32)
    bound_o = math.sqrt(6.0 / (embed_dim + input_dim))
    w_o = jax.random.uniform(k_o, (input_dim, embed_dim),
                             minval=-bound_o, maxval=bound_o, dtype=jnp.float32)
    b_o = jnp.zeros((input_dim,), dtype=jnp.float32)

    out = multihead_attention(x, w_qkv, w_o, b_o, num_heads=num_heads)
    out = jax.block_until_ready(out)

    ref = reference_mha(x, w_qkv, w_o, b_o, num_heads=num_heads)
    assert out.shape == (B, L, input_dim)
    max_err = float(jnp.max(jnp.abs(out - ref)))
    # Tolerance accounts for approx-reciprocal softmax normalization.
    assert jnp.allclose(out, ref, atol=2e-3, rtol=2e-3), f"mismatch vs reference (max abs err {max_err})"

    print("KERNEL_OK")
</pallas_src>

<mosaic_0001>
module attributes {stable_mosaic.version = 11 : i64} {
  func.func @_mha_flash_kernel(%arg0: i32, %arg1: i32, %arg2: i32, %arg3: memref<1x8x128xf32, #tpu.memory_space<vmem>>, %arg4: memref<1x8x128xf32, #tpu.memory_space<vmem>>, %arg5: memref<128x32xf32, #tpu.memory_space<vmem>>, %arg6: memref<128x64xf32, #tpu.memory_space<vmem>>, %arg7: memref<32x128xf32, #tpu.memory_space<vmem>>, %arg8: memref<1x128xf32, #tpu.memory_space<vmem>>, %arg9: memref<1x8x128xf32, #tpu.memory_space<vmem>>, %arg10: memref<4x8x8xf32, #tpu.memory_space<vmem>>, %arg11: memref<4x8x8xf32, #tpu.memory_space<vmem>>, %arg12: memref<4x8x1xf32, #tpu.memory_space<vmem>>, %arg13: memref<4x8x1xf32, #tpu.memory_space<vmem>>) attributes {dimension_semantics = [#tpu.dimension_semantics<parallel>, #tpu.dimension_semantics<parallel>, #tpu.dimension_semantics<arbitrary>], iteration_bounds = array<i64: 2, 1, 1>, scalar_prefetch = 0 : i64, scratch_operands = 4 : i64, tpu.core_type = #tpu.core_type<tc>, window_params = [{transform_indices = @transform_0, window_bounds = array<i64: 1, 8, 128>}, {transform_indices = @transform_1, window_bounds = array<i64: 1, 8, 128>}, {pipeline_mode = #tpu.pipeline_mode<synchronous>, transform_indices = @transform_2, window_bounds = array<i64: 128, 32>}, {pipeline_mode = #tpu.pipeline_mode<synchronous>, transform_indices = @transform_3, window_bounds = array<i64: 128, 64>}, {pipeline_mode = #tpu.pipeline_mode<synchronous>, transform_indices = @transform_4, window_bounds = array<i64: 32, 128>}, {pipeline_mode = #tpu.pipeline_mode<synchronous>, transform_indices = @transform_5, window_bounds = array<i64: 1, 128>}, {transform_indices = @transform_6, window_bounds = array<i64: 1, 8, 128>}]} {
    %c0_i32 = arith.constant 0 : i32
    %0 = arith.cmpi eq, %arg2, %c0_i32 : i32
    %1 = arith.extui %0 : i1 to i32
    %c0_i32_0 = arith.constant 0 : i32
    %2 = arith.cmpi ne, %1, %c0_i32_0 : i32
    scf.if %2 {
      %c0_32 = arith.constant 0 : index
      %c0_33 = arith.constant 0 : index
      %c0_34 = arith.constant 0 : index
      %40 = vector.load %arg3[%c0_32, %c0_33, %c0_34] : memref<1x8x128xf32, #tpu.memory_space<vmem>>, vector<1x8x128xf32>
      %41 = vector.shape_cast %40 : vector<1x8x128xf32> to vector<8x128xf32>
      %c0_35 = arith.constant 0 : index
      %c0_36 = arith.constant 0 : index
      %42 = vector.load %arg5[%c0_35, %c0_36] : memref<128x32xf32, #tpu.memory_space<vmem>>, vector<128x32xf32>
      %cst_37 = arith.constant dense<0.000000e+00> : vector<8x32xf32>
      %43 = tpu.matmul %41, %42, %cst_37 {dimension_numbers = #tpu.dot_dimension_numbers<[1], [0], [0], [1], [0, 0, 1, 1], [], []>} : vector<8x128xf32>, vector<128x32xf32>, vector<8x32xf32> -> vector<8x32xf32>
      %44 = vector.shape_cast %43 : vector<8x32xf32> to vector<8x4x8xf32>
      %45 = tpu.transpose %44, [1, 0, 2] : vector<8x4x8xf32> -> vector<4x8x8xf32>
      %c0_38 = arith.constant 0 : index
      %c0_39 = arith.constant 0 : index
      %c0_40 = arith.constant 0 : index
      %46 = vector.load %arg10[%c0_38, %c0_39, %c0_40] : memref<4x8x8xf32, #tpu.memory_space<vmem>>, vector<4x8x8xf32>
      tpu.vector_store %arg10[%c0_38, %c0_39, %c0_40], %45 {strides = array<i32>} : memref<4x8x8xf32, #tpu.memory_space<vmem>>, vector<4x8x8xf32>,
      %cst_41 = arith.constant 0xFF800000 : f32
      %47 = vector.broadcast %cst_41 : f32 to vector<4x8x1xf32>
      %c0_42 = arith.constant 0 : index
      %c0_43 = arith.constant 0 : index
      %c0_44 = arith.constant 0 : index
      %48 = vector.load %arg12[%c0_42, %c0_43, %c0_44] : memref<4x8x1xf32, #tpu.memory_space<vmem>>, vector<4x8x1xf32>
      tpu.vector_store %arg12[%c0_42, %c0_43, %c0_44], %47 {strides = array<i32>} : memref<4x8x1xf32, #tpu.memory_space<vmem>>, vector<4x8x1xf32>,
      %cst_45 = arith.constant 0.000000e+00 : f32
      %49 = vector.broadcast %cst_45 : f32 to vector<4x8x1xf32>
      %c0_46 = arith.constant 0 : index
      %c0_47 = arith.constant 0 : index
      %c0_48 = arith.constant 0 : index
      %50 = vector.load %arg13[%c0_46, %c0_47, %c0_48] : memref<4x8x1xf32, #tpu.memory_space<vmem>>, vector<4x8x1xf32>
      tpu.vector_store %arg13[%c0_46, %c0_47, %c0_48], %49 {strides = array<i32>} : memref<4x8x1xf32, #tpu.memory_space<vmem>>, vector<4x8x1xf32>,
      %cst_49 = arith.constant 0.000000e+00 : f32
      %51 = vector.broadcast %cst_49 : f32 to vector<4x8x8xf32>
      %c0_50 = arith.constant 0 : index
      %c0_51 = arith.constant 0 : index
      %c0_52 = arith.constant 0 : index
      %52 = vector.load %arg11[%c0_50, %c0_51, %c0_52] : memref<4x8x8xf32, #tpu.memory_space<vmem>>, vector<4x8x8xf32>
      tpu.vector_store %arg11[%c0_50, %c0_51, %c0_52], %51 {strides = array<i32>} : memref<4x8x8xf32, #tpu.memory_space<vmem>>, vector<4x8x8xf32>,
    } else {
    }
    %c0 = arith.constant 0 : index
    %c0_1 = arith.constant 0 : index
    %c0_2 = arith.constant 0 : index
    %3 = vector.load %arg4[%c0, %c0_1, %c0_2] : memref<1x8x128xf32, #tpu.memory_space<vmem>>, vector<1x8x128xf32>
    %4 = vector.shape_cast %3 : vector<1x8x128xf32> to vector<8x128xf32>
    %c0_3 = arith.constant 0 : index
    %c0_4 = arith.constant 0 : index
    %5 = vector.load %arg6[%c0_3, %c0_4] : memref<128x64xf32, #tpu.memory_space<vmem>>, vector<128x64xf32>
    %cst = arith.constant dense<0.000000e+00> : vector<8x64xf32>
    %6 = tpu.matmul %4, %5, %cst {dimension_numbers = #tpu.dot_dimension_numbers<[1], [0], [0], [1], [0, 0, 1, 1], [], []>} : vector<8x128xf32>, vector<128x64xf32>, vector<8x64xf32> -> vector<8x64xf32>
    %7 = vector.extract_strided_slice %6 {offsets = [0, 0], sizes = [8, 32], strides = [1, 1]} : vector<8x64xf32> to vector<8x32xf32>
    %8 = vector.shape_cast %7 : vector<8x32xf32> to vector<8x4x8xf32>
    %9 = tpu.transpose %8, [1, 0, 2] : vector<8x4x8xf32> -> vector<4x8x8xf32>
    %10 = vector.extract_strided_slice %6 {offsets = [0, 32], sizes = [8, 32], strides = [1, 1]} : vector<8x64xf32> to vector<8x32xf32>
    %11 = vector.shape_cast %10 : vector<8x32xf32> to vector<8x4x8xf32>
    %12 = tpu.transpose %11, [1, 0, 2] : vector<8x4x8xf32> -> vector<4x8x8xf32>
    %c0_5 = arith.constant 0 : index
    %c0_6 = arith.constant 0 : index
    %c0_7 = arith.constant 0 : index
    %13 = vector.load %arg10[%c0_5, %c0_6, %c0_7] : memref<4x8x8xf32, #tpu.memory_space<vmem>>, vector<4x8x8xf32>
    "tpu.trace_start"() <{level = 10 : i32, message = "hqd,hkd->hqk"}> : () -> ()
    %cst_8 = arith.constant dense<0.000000e+00> : vector<4x8x8xf32>
    %14 = tpu.matmul %13, %9, %cst_8 {dimension_numbers = #tpu.dot_dimension_numbers<[2], [2], [1], [1], [0, 0, 0, 1, 1, 1], [0], [0]>} : vector<4x8x8xf32>, vector<4x8x8xf32>, vector<4x8x8xf32> -> vector<4x8x8xf32>
    "tpu.trace_stop"() : () -> ()
    %c0_9 = arith.constant 0 : index
    %c0_10 = arith.constant 0 : index
    %c0_11 = arith.constant 0 : index
    %15 = vector.load %arg12[%c0_9, %c0_10, %c0_11] : memref<4x8x1xf32, #tpu.memory_space<vmem>>, vector<4x8x1xf32>
    %cst_12 = arith.constant dense<0xFF800000> : vector<4x8xf32>
    %16 = vector.multi_reduction <maximumf>, %14, %cst_12 [2] : vector<4x8x8xf32> to vector<4x8xf32>
    %17 = vector.shape_cast %16 : vector<4x8xf32> to vector<4x8x1xf32>
    %18 = arith.maximumf %15, %17 : vector<4x8x1xf32>
    %19 = arith.subf %15, %18 : vector<4x8x1xf32>
    %20 = math.exp %19 : vector<4x8x1xf32>
    %21 = vector.broadcast %18 : vector<4x8x1xf32> to vector<4x8x8xf32>
    %22 = arith.subf %14, %21 : vector<4x8x8xf32>
    %23 = math.exp %22 : vector<4x8x8xf32>
    %c0_13 = arith.constant 0 : index
    %c0_14 = arith.constant 0 : index
    %c0_15 = arith.constant 0 : index
    %24 = vector.load %arg13[%c0_13, %c0_14, %c0_15] : memref<4x8x1xf32, #tpu.memory_space<vmem>>, vector<4x8x1xf32>
    %25 = arith.mulf %20, %24 : vector<4x8x1xf32>
    %cst_16 = arith.constant dense<0.000000e+00> : vector<4x8xf32>
    %26 = vector.multi_reduction <add>, %23, %cst_16 [2] : vector<4x8x8xf32> to vector<4x8xf32>
    %27 = vector.shape_cast %26 : vector<4x8xf32> to vector<4x8x1xf32>
    %28 = arith.addf %25, %27 : vector<4x8x1xf32>
    %c0_17 = arith.constant 0 : index
    %c0_18 = arith.constant 0 : index
    %c0_19 = arith.constant 0 : index
    %29 = vector.load %arg13[%c0_17, %c0_18, %c0_19] : memref<4x8x1xf32, #tpu.memory_space<vmem>>, vector<4x8x1xf32>
    tpu.vector_store %arg13[%c0_17, %c0_18, %c0_19], %28 {strides = array<i32>} : memref<4x8x1xf32, #tpu.memory_space<vmem>>, vector<4x8x1xf32>,
    "tpu.trace_start"() <{level = 10 : i32, message = "hqk,hkd->hqd"}> : () -> ()
    %cst_20 = arith.constant dense<0.000000e+00> : vector<4x8x8xf32>
    %30 = tpu.matmul %23, %12, %cst_20 {dimension_numbers = #tpu.dot_dimension_numbers<[2], [1], [1], [2], [0, 0, 0, 1, 1, 2], [0], [0]>} : vector<4x8x8xf32>, vector<4x8x8xf32>, vector<4x8x8xf32> -> vector<4x8x8xf32>
    "tpu.trace_stop"() : () -> ()
    %c0_21 = arith.constant 0 : index
    %c0_22 = arith.constant 0 : index
    %c0_23 = arith.constant 0 : index
    %31 = vector.load %arg11[%c0_21, %c0_22, %c0_23] : memref<4x8x8xf32, #tpu.memory_space<vmem>>, vector<4x8x8xf32>
    %32 = vector.broadcast %20 : vector<4x8x1xf32> to vector<4x8x8xf32>
    %33 = arith.mulf %32, %31 : vector<4x8x8xf32>
    %34 = arith.addf %33, %30 : vector<4x8x8xf32>
    %c0_24 = arith.constant 0 : index
    %c0_25 = arith.constant 0 : index
    %c0_26 = arith.constant 0 : index
    %35 = vector.load %arg11[%c0_24, %c0_25, %c0_26] : memref<4x8x8xf32, #tpu.memory_space<vmem>>, vector<4x8x8xf32>
    tpu.vector_store %arg11[%c0_24, %c0_25, %c0_26], %34 {strides = array<i32>} : memref<4x8x8xf32, #tpu.memory_space<vmem>>, vector<4x8x8xf32>,
    %c0_27 = arith.constant 0 : index
    %c0_28 = arith.constant 0 : index
    %c0_29 = arith.constant 0 : index
    %36 = vector.load %arg12[%c0_27, %c0_28, %c0_29] : memref<4x8x1xf32, #tpu.memory_space<vmem>>, vector<4x8x1xf32>
    tpu.vector_store %arg12[%c0_27, %c0_28, %c0_29], %18 {strides = array<i32>} : memref<4x8x1xf32, #tpu.memory_space<vmem>>, vector<4x8x1xf32>,
    %c0_i32_30 = arith.constant 0 : i32
    %37 = arith.cmpi eq, %arg2, %c0_i32_30 : i32
    %38 = arith.extui %37 : i1 to i32
    %c0_i32_31 = arith.constant 0 : i32
    %39 = arith.cmpi ne, %38, %c0_i32_31 : i32
    scf.if %39 {
      %c0_32 = arith.constant 0 : index
      %c0_33 = arith.constant 0 : index
      %c0_34 = arith.constant 0 : index
      %40 = vector.load %arg13[%c0_32, %c0_33, %c0_34] : memref<4x8x1xf32, #tpu.memory_space<vmem>>, vector<4x8x1xf32>
      %41 = tpu.reciprocal %40 {approx = true} : vector<4x8x1xf32> -> vector<4x8x1xf32>
      %c0_35 = arith.constant 0 : index
      %c0_36 = arith.constant 0 : index
      %c0_37 = arith.constant 0 : index
      %42 = vector.load %arg11[%c0_35, %c0_36, %c0_37] : memref<4x8x8xf32, #tpu.memory_space<vmem>>, vector<4x8x8xf32>
      %43 = vector.broadcast %41 : vector<4x8x1xf32> to vector<4x8x8xf32>
      %44 = arith.mulf %42, %43 : vector<4x8x8xf32>
      %45 = tpu.transpose %44, [1, 0, 2] : vector<4x8x8xf32> -> vector<8x4x8xf32>
      %46 = vector.shape_cast %45 : vector<8x4x8xf32> to vector<8x32xf32>
      %c0_38 = arith.constant 0 : index
      %c0_39 = arith.constant 0 : index
      %47 = vector.load %arg7[%c0_38, %c0_39] : memref<32x128xf32, #tpu.memory_space<vmem>>, vector<32x128xf32>
      %cst_40 = arith.constant dense<0.000000e+00> : vector<8x128xf32>
      %48 = tpu.matmul %46, %47, %cst_40 {dimension_numbers = #tpu.dot_dimension_numbers<[1], [0], [0], [1], [0, 0, 1, 1], [], []>} : vector<8x32xf32>, vector<32x128xf32>, vector<8x128xf32> -> vector<8x128xf32>
      %c0_41 = arith.constant 0 : index
      %c0_42 = arith.constant 0 : index
      %49 = vector.load %arg8[%c0_41, %c0_42] : memref<1x128xf32, #tpu.memory_space<vmem>>, vector<1x128xf32>
      %50 = vector.broadcast %49 : vector<1x128xf32> to vector<8x128xf32>
      %51 = arith.addf %48, %50 : vector<8x128xf32>
      %c0_43 = arith.constant 0 : index
      %c0_44 = arith.constant 0 : index
      %c0_45 = arith.constant 0 : index
      %52 = vector.load %arg9[%c0_43, %c0_44, %c0_45] : memref<1x8x128xf32, #tpu.memory_space<vmem>>, vector<1x8x128xf32>
      %53 = vector.shape_cast %52 : vector<1x8x128xf32> to vector<8x128xf32>
      %54 = vector.shape_cast %51 : vector<8x128xf32> to vector<1x8x128xf32>
      tpu.vector_store %arg9[%c0_43, %c0_44, %c0_45], %54 {strides = array<i32>} : memref<1x8x128xf32, #tpu.memory_space<vmem>>, vector<1x8x128xf32>,
    } else {
    }
    return
  }
  func.func @transform_0(%arg0: i32, %arg1: i32, %arg2: i32) -> (i32, i32, i32) {
    %c0_i32 = arith.constant 0 : i32
    %c0_i32_0 = arith.constant 0 : i32
    return %arg0, %arg1, %c0_i32 : i32, i32, i32
  }
  func.func @transform_1(%arg0: i32, %arg1: i32, %arg2: i32) -> (i32, i32, i32) {
    %c0_i32 = arith.constant 0 : i32
    %c0_i32_0 = arith.constant 0 : i32
    return %arg0, %arg2, %c0_i32 : i32, i32, i32
  }
  func.func @transform_2(%arg0: i32, %arg1: i32, %arg2: i32) -> (i32, i32) {
    %c0_i32 = arith.constant 0 : i32
    %c0_i32_0 = arith.constant 0 : i32
    %c0_i32_1 = arith.constant 0 : i32
    return %c0_i32, %c0_i32_0 : i32, i32
  }
  func.func @transform_3(%arg0: i32, %arg1: i32, %arg2: i32) -> (i32, i32) {
    %c0_i32 = arith.constant 0 : i32
    %c0_i32_0 = arith.constant 0 : i32
    %c0_i32_1 = arith.constant 0 : i32
    return %c0_i32, %c0_i32_0 : i32, i32
  }
  func.func @transform_4(%arg0: i32, %arg1: i32, %arg2: i32) -> (i32, i32) {
    %c0_i32 = arith.constant 0 : i32
    %c0_i32_0 = arith.constant 0 : i32
    %c0_i32_1 = arith.constant 0 : i32
    return %c0_i32, %c0_i32_0 : i32, i32
  }
  func.func @transform_5(%arg0: i32, %arg1: i32, %arg2: i32) -> (i32, i32) {
    %c0_i32 = arith.constant 0 : i32
    %c0_i32_0 = arith.constant 0 : i32
    %c0_i32_1 = arith.constant 0 : i32
    return %c0_i32, %c0_i32_0 : i32, i32
  }
  func.func @transform_6(%arg0: i32, %arg1: i32, %arg2: i32) -> (i32, i32, i32) {
    %c0_i32 = arith.constant 0 : i32
    %c0_i32_0 = arith.constant 0 : i32
    return %arg0, %arg1, %c0_i32 : i32, i32, i32
  }
}

</mosaic_0001>

<llo_original>
// kernel: tpu_custom_call.1
$region0: #{tpu_custom_call.1}
  #allocation0 [shape = 'u32[]', space=smem, size = 0x4, offset = 0x4, fixed_abs, tag = 'smem constant byte address 0x4 - core index']
  #allocation1 [shape = 'u32[144,128]{1,0:T(1,128)}', space=vmem, size = 0x12000, scoped, tag = 'internal scratch']
  #allocation2 [shape = 'f32[4,8,8]{2,1,0:T(8,128)}', space=vmem, size = 0x4000, scoped, tag = 'scratch operand']
  #allocation3 [shape = 'f32[4,8,8]{2,1,0:T(8,128)}', space=vmem, size = 0x4000, scoped, tag = 'scratch operand']
  #allocation4 [shape = 'f32[4,8,1]{2,1,0:T(8,128)}', space=vmem, size = 0x4000, scoped, tag = 'scratch operand']
  #allocation5 [shape = 'f32[4,8,1]{2,1,0:T(8,128)}', space=vmem, size = 0x4000, scoped, tag = 'scratch operand']
  %s0 = inlined_call_operand.vmem [shape: f32[2,8,128], index: 0, kind: input, shape index: {}]
  %s1 = inlined_call_operand.vmem [shape: f32[2,8,128], index: 1, kind: input, shape index: {}]
  %s2 = inlined_call_operand.vmem [shape: f32[128,32], index: 2, kind: input, shape index: {}]
  %s3 = inlined_call_operand.vmem [shape: f32[128,64], index: 3, kind: input, shape index: {}]
  %s4 = inlined_call_operand.vmem [shape: f32[32,128], index: 4, kind: input, shape index: {}]
  %s5 = inlined_call_operand.vmem [shape: f32[1,128], index: 5, kind: input, shape index: {}]
  %s6 = inlined_call_operand.hbm [shape: f32[2,8,128], index: 6, kind: output, shape index: {}]
  %s7 = sld [smem:[#allocation0]]
  $region65: #{tpu_custom_call.1} parent=0
    _
  %s9 = ssub.s32 1, %s7
  %s10 = scalar_select 0, %s9, %s7
  $region1: #{tpu_custom_call.1} parent=0
    #allocation6 [shape = 'u8[8192]{0}', space=vmem, size = 0x2000, scoped, tag = 'output window, operand 0']
    #allocation7 [shape = 's32[2]{0}', space=sflag, size = 0x8, scoped, tag = 'scoped memory for tpu_custom_call.1']
    %11 = vsyncpa [#allocation7], 0
    %s12 = scalar_lea.sflag [#allocation7], 1
    %13 = vsyncpa %s12, 0
    loop: start=0, step=1, limit=4
    $region2: #{tpu_custom_call.1} parent=1 // loop_pre_header
      _
    $region3: #{tpu_custom_call.1} parent=1 // loop_header
      %s15 = sphi 0, %s19
      %p16 = scmp.ge.s32.totalorder %s15, 4
      %s22 = sphi 0, %s41
      %s23 = sphi 0, %s37
      %s24 = sphi 0, %s33
      %s25 = sphi 0, %s22
      %s26 = sphi 0, %s23
      %s27 = sphi 0, %s24
      %s28 = sphi 0, %s25
      %s29 = sphi 0, %s26
      %s30 = sphi 0, %s27
      %s46 = sphi 0, %s48
      %s49 = sphi 0, %s46
      %s50 = sphi 0, %s49
      %s66 = sphi 0, %s50
      %s74 = sphi 0, %s76
      %s77 = sphi 0, %s74
      %s78 = sphi 0, %s77
      %s94 = sphi 0, %s78
      %s98 = sphi 0, %s98
      %s100 = sphi 0, %s98
      %s101 = sphi 0, %s100
      %s115 = sphi 0, %s101
      %s119 = sphi 0, %s119
      %s121 = sphi 0, %s119
      %s122 = sphi 0, %s121
      %s136 = sphi 0, %s122
      %s140 = sphi 0, %s140
      %s142 = sphi 0, %s140
      %s143 = sphi 0, %s142
      %s157 = sphi 0, %s143
      %s161 = sphi 0, %s161
      %s163 = sphi 0, %s161
      %s164 = sphi 0, %s163
      %s178 = sphi 0, %s164
      %s186 = sphi 0, %s188
      %s189 = sphi 0, %s186
      %s190 = sphi 0, %s189
      %s206 = sphi 0, %s190
    $region4: #{tpu_custom_call.1} parent=1 // loop_header_branch
      %18 = sbr.rel (%p16) target = $region8
    $region5: #{tpu_custom_call.1} parent=1 // loop_body
      %s20 = ssub.s32 %s15, 1
      %s21 = ssub.s32 %s15, 2
      %s31 = sadd.s32 1, %s24
      %p32 = scmp.ge.s32.totalorder %s31, 1
      %s33 = scalar_select %p32, 0, %s31
      %s34 = sadd.s32 1, %s23
      %s35 = scalar_select %p32, %s34, %s23
      %p36 = scmp.ge.s32.totalorder %s35, 1
      %s37 = scalar_select %p36, 0, %s35
      %s38 = sadd.s32 1, %s22
      %s39 = scalar_select %p36, %s38, %s22
      %p40 = scmp.ge.s32.totalorder %s39, 2
      %s41 = scalar_select %p40, 0, %s39
      %s42 = ssub.s32 %s22, %s41
      %s43 = ssub.s32 %s23, %s37
      %s44 = sor.u32 %s42, %s43
      %p45 = scmp.eq.s32.totalorder %s44, 0
      %s47 = sadd.s32 %s46, 1
      %s48 = scalar_select %p45, %s46, %s47
      %p51 = pneg %p45
      %p52 = scmp.eq.s32.totalorder %s15, 1
      %p53 = por %p51, %p52
      %p54 = scmp.ne.s32.totalorder %s46, %s49
      %p55 = scmp.eq.s32.totalorder %s15, 0
      %p56 = por %p54, %p55
      %p57 = scmp.ne.s32.totalorder %s46, %s49
      %p58 = scmp.eq.s32.totalorder %s20, 1
      %p59 = por %p57, %p58
      %p60 = scmp.ne.s32.totalorder %s49, %s50
      %p61 = scmp.eq.s32.totalorder %s20, 0
      %p62 = por %p60, %p61
      %p63 = scmp.ne.s32.totalorder %s49, %s50
      %p64 = scmp.eq.s32.totalorder %s21, 1
      %p65 = por %p63, %p64
      %p67 = scmp.ne.s32.totalorder %s50, %s66
      %p68 = scmp.eq.s32.totalorder %s21, 0
      %p69 = por %p67, %p68
      %s70 = ssub.s32 %s22, %s41
      %s71 = ssub.s32 %s24, %s33
      %s72 = sor.u32 %s70, %s71
      %p73 = scmp.eq.s32.totalorder %s72, 0
      %s75 = sadd.s32 %s74, 1
      %s76 = scalar_select %p73, %s74, %s75
      %p79 = pneg %p73
      %p80 = scmp.eq.s32.totalorder %s15, 1
      %p81 = por %p79, %p80
      %p82 = scmp.ne.s32.totalorder %s74, %s77
      %p83 = scmp.eq.s32.totalorder %s15, 0
      %p84 = por %p82, %p83
      %p85 = scmp.ne.s32.totalorder %s74, %s77
      %p86 = scmp.eq.s32.totalorder %s20, 1
      %p87 = por %p85, %p86
      %p88 = scmp.ne.s32.totalorder %s77, %s78
      %p89 = scmp.eq.s32.totalorder %s20, 0
      %p90 = por %p88, %p89
      %p91 = scmp.ne.s32.totalorder %s77, %s78
      %p92 = scmp.eq.s32.totalorder %s21, 1
      %p93 = por %p91, %p92
      %p95 = scmp.ne.s32.totalorder %s78, %s94
      %p96 = scmp.eq.s32.totalorder %s21, 0
      %p97 = por %p95, %p96
      %s99 = sadd.s32 %s98, 1
      %p102 = scmp.eq.s32.totalorder %s15, 1
      %p103 = scmp.ne.s32.totalorder %s98, %s100
      %p104 = scmp.eq.s32.totalorder %s15, 0
      %p105 = por %p103, %p104
      %p106 = scmp.ne.s32.totalorder %s98, %s100
      %p107 = scmp.eq.s32.totalorder %s20, 1
      %p108 = por %p106, %p107
      %p109 = scmp.ne.s32.totalorder %s100, %s101
      %p110 = scmp.eq.s32.totalorder %s20, 0
      %p111 = por %p109, %p110
      %p112 = scmp.ne.s32.totalorder %s100, %s101
      %p113 = scmp.eq.s32.totalorder %s21, 1
      %p114 = por %p112, %p113
      %p116 = scmp.ne.s32.totalorder %s101, %s115
      %p117 = scmp.eq.s32.totalorder %s21, 0
      %p118 = por %p116, %p117
      %s120 = sadd.s32 %s119, 1
      %p123 = scmp.eq.s32.totalorder %s15, 1
      %p124 = scmp.ne.s32.totalorder %s119, %s121
      %p125 = scmp.eq.s32.totalorder %s15, 0
      %p126 = por %p124, %p125
      %p127 = scmp.ne.s32.totalorder %s119, %s121
      %p128 = scmp.eq.s32.totalorder %s20, 1
      %p129 = por %p127, %p128
      %p130 = scmp.ne.s32.totalorder %s121, %s122
      %p131 = scmp.eq.s32.totalorder %s20, 0
      %p132 = por %p130, %p131
      %p133 = scmp.ne.s32.totalorder %s121, %s122
      %p134 = scmp.eq.s32.totalorder %s21, 1
      %p135 = por %p133, %p134
      %p137 = scmp.ne.s32.totalorder %s122, %s136
      %p138 = scmp.eq.s32.totalorder %s21, 0
      %p139 = por %p137, %p138
      %s141 = sadd.s32 %s140, 1
      %p144 = scmp.eq.s32.totalorder %s15, 1
      %p145 = scmp.ne.s32.totalorder %s140, %s142
      %p146 = scmp.eq.s32.totalorder %s15, 0
      %p147 = por %p145, %p146
      %p148 = scmp.ne.s32.totalorder %s140, %s142
      %p149 = scmp.eq.s32.totalorder %s20, 1
      %p150 = por %p148, %p149
      %p151 = scmp.ne.s32.totalorder %s142, %s143
      %p152 = scmp.eq.s32.totalorder %s20, 0
      %p153 = por %p151, %p152
      %p154 = scmp.ne.s32.totalorder %s142, %s143
      %p155 = scmp.eq.s32.totalorder %s21, 1
      %p156 = por %p154, %p155
      %p158 = scmp.ne.s32.totalorder %s143, %s157
      %p159 = scmp.eq.s32.totalorder %s21, 0
      %p160 = por %p158, %p159
      %s162 = sadd.s32 %s161, 1
      %p165 = scmp.eq.s32.totalorder %s15, 1
      %p166 = scmp.ne.s32.totalorder %s161, %s163
      %p167 = scmp.eq.s32.totalorder %s15, 0
      %p168 = por %p166, %p167
      %p169 = scmp.ne.s32.totalorder %s161, %s163
      %p170 = scmp.eq.s32.totalorder %s20, 1
      %p171 = por %p169, %p170
      %p172 = scmp.ne.s32.totalorder %s163, %s164
      %p173 = scmp.eq.s32.totalorder %s20, 0
      %p174 = por %p172, %p173
      %p175 = scmp.ne.s32.totalorder %s163, %s164
      %p176 = scmp.eq.s32.totalorder %s21, 1
      %p177 = por %p175, %p176
      %p179 = scmp.ne.s32.totalorder %s164, %s178
      %p180 = scmp.eq.s32.totalorder %s21, 0
      %p181 = por %p179, %p180
      %s182 = ssub.s32 %s22, %s41
      %s183 = ssub.s32 %s23, %s37
      %s184 = sor.u32 %s182, %s183
      %p185 = scmp.eq.s32.totalorder %s184, 0
      %s187 = sadd.s32 %s186, 1
      %s188 = scalar_select %p185, %s186, %s187
      %p191 = pneg %p185
      %p192 = scmp.eq.s32.totalorder %s15, 1
      %p193 = por %p191, %p192
      %p194 = scmp.ne.s32.totalorder %s186, %s189
      %p195 = scmp.eq.s32.totalorder %s15, 0
      %p196 = por %p194, %p195
      %p197 = scmp.ne.s32.totalorder %s186, %s189
      %p198 = scmp.eq.s32.totalorder %s20, 1
      %p199 = por %p197, %p198
      %p200 = scmp.ne.s32.totalorder %s189, %s190
      %p201 = scmp.eq.s32.totalorder %s20, 0
      %p202 = por %p200, %p201
      %p203 = scmp.ne.s32.totalorder %s189, %s190
      %p204 = scmp.eq.s32.totalorder %s21, 1
      %p205 = por %p203, %p204
      %p207 = scmp.ne.s32.totalorder %s190, %s206
      %p208 = scmp.eq.s32.totalorder %s21, 0
      %p209 = por %p207, %p208
      %p210 = scmp.le.s32.totalorder 1, %s15
      %p211 = scmp.lt.s32.totalorder %s15, 3
      %p212 = pnand %p210, %p211
      %p213 = pneg %p212
      // Predicated region
      $region9: #{tpu_custom_call.1} parent=5 // pred_check
        _
      $region10: #{tpu_custom_call.1} parent=5 // pred_check_branch
        %215 = sbr.rel (%p212) target = $region12
      $region11: #{tpu_custom_call.1} parent=5 // pred_region
        %s216 = ssub.s32 %s15, 1
        // Predicated region
        $region13: #{tpu_custom_call.1} parent=11 // pred_check
          %p217 = pneg %p111
        $region14: #{tpu_custom_call.1} parent=11 // pred_check_branch
          %219 = sbr.rel (%p217) target = $region16
        $region15: #{tpu_custom_call.1} parent=11 // pred_region
          _
        $region16: #{tpu_custom_call.1} parent=11 // pred_fallthru
          _
        // Predicated region
        $region17: #{tpu_custom_call.1} parent=11 // pred_check
          %p220 = pneg %p132
        $region18: #{tpu_custom_call.1} parent=11 // pred_check_branch
          %222 = sbr.rel (%p220) target = $region20
        $region19: #{tpu_custom_call.1} parent=11 // pred_region
          _
        $region20: #{tpu_custom_call.1} parent=11 // pred_fallthru
          _
        // Predicated region
        $region21: #{tpu_custom_call.1} parent=11 // pred_check
          %p223 = pneg %p153
        $region22: #{tpu_custom_call.1} parent=11 // pred_check_branch
          %225 = sbr.rel (%p223) target = $region24
        $region23: #{tpu_custom_call.1} parent=11 // pred_region
          _
        $region24: #{tpu_custom_call.1} parent=11 // pred_fallthru
          _
        // Predicated region
        $region25: #{tpu_custom_call.1} parent=11 // pred_check
          %p226 = pneg %p174
        $region26: #{tpu_custom_call.1} parent=11 // pred_check_branch
          %228 = sbr.rel (%p226) target = $region28
        $region27: #{tpu_custom_call.1} parent=11 // pred_region
          _
        $region28: #{tpu_custom_call.1} parent=11 // pred_fallthru
          _
      $region12: #{tpu_custom_call.1} parent=5 // pred_fallthru
        _
      %p229 = scmp.lt.s32.totalorder %s15, 2
      // Predicated region
      $region29: #{tpu_custom_call.1} parent=5 // pred_check
        %p230 = pneg %p229
      $region30: #{tpu_custom_call.1} parent=5 // pred_check_branch
        %232 = sbr.rel (%p230) target = $region32
      $region31: #{tpu_custom_call.1} parent=5 // pred_region
        // Predicated region
        $region33: #{tpu_custom_call.1} parent=31 // pred_check
          %p233 = pneg %p56
        $region34: #{tpu_custom_call.1} parent=31 // pred_check_branch
          %235 = sbr.rel (%p233) target = $region36
        $region35: #{tpu_custom_call.1} parent=31 // pred_region
          %p236 = scmp.lt.s32.totalorder %s22, 1
          %s237 = scalar_select %p236, %s22, 1
          %p238 = scmp.lt.s32.totalorder %s23, 0
          %s239 = scalar_select %p238, %s23, 0
          %s240 = sadd.s32 %s239, %s237
          %s241 = smul.addr %s240, 8
          %s242 = scalar_lea.vmem %s0, %s241
        $region36: #{tpu_custom_call.1} parent=31 // pred_fallthru
          _
        // Predicated region
        $region37: #{tpu_custom_call.1} parent=31 // pred_check
          %p243 = pneg %p84
        $region38: #{tpu_custom_call.1} parent=31 // pred_check_branch
          %245 = sbr.rel (%p243) target = $region40
        $region39: #{tpu_custom_call.1} parent=31 // pred_region
          %p246 = scmp.lt.s32.totalorder %s22, 1
          %s247 = scalar_select %p246, %s22, 1
          %p248 = scmp.lt.s32.totalorder %s24, 0
          %s249 = scalar_select %p248, %s24, 0
          %s250 = sadd.s32 %s249, %s247
          %s251 = smul.addr %s250, 8
          %s252 = scalar_lea.vmem %s1, %s251
        $region40: #{tpu_custom_call.1} parent=31 // pred_fallthru
          _
      $region32: #{tpu_custom_call.1} parent=5 // pred_fallthru
        _
      %p253 = scmp.le.s32.totalorder 1, %s15
      %p254 = scmp.lt.s32.totalorder %s15, 3
      %p255 = pnand %p253, %p254
      %p256 = pneg %p255
      // Predicated region
      $region41: #{tpu_custom_call.1} parent=5 // pred_check
        _
      $region42: #{tpu_custom_call.1} parent=5 // pred_check_branch
        %258 = sbr.rel (%p255) target = $region44
      $region43: #{tpu_custom_call.1} parent=5 // pred_region
        %s259 = ssub.s32 %s15, 1
        %p260 = scmp.lt.s32.totalorder %s25, 1
        %s261 = scalar_select %p260, %s25, 1
        %p262 = scmp.lt.s32.totalorder %s26, 0
        %s263 = scalar_select %p262, %s26, 0
        %s264 = sadd.s32 %s263, %s261
        %s265 = smul.addr %s264, 8
        %s266 = scalar_lea.vmem %s0, %s265
        %p267 = pneg %p62
        %p268 = pneg %p59
        %p269 = scmp.lt.s32.totalorder %s25, 1
        %s270 = scalar_select %p269, %s25, 1
        %p271 = scmp.lt.s32.totalorder %s27, 0
        %s272 = scalar_select %p271, %s27, 0
        %s273 = sadd.s32 %s272, %s270
        %s274 = smul.addr %s273, 8
        %s275 = scalar_lea.vmem %s1, %s274
        %p276 = pneg %p90
        %p277 = pneg %p87
        %p278 = pneg %p111
        %p279 = pneg %p108
        %p280 = pneg %p132
        %p281 = pneg %p129
        %p282 = pneg %p153
        %p283 = pneg %p150
        %p284 = pneg %p174
        %p285 = pneg %p171
        %p286 = pneg %p202
        %p287 = pneg %p199
        %s288 = sand.u32 %s189, 1
        %s289 = scalar_lea.sflag [#allocation7], %s288
        %s290 = sand.u32 %s189, 1
        %s291 = smul.addr %s290, 8
        %s292 = scalar_lea.vmem [#allocation6], %s291
        %p293 = scmp.lt.s32.totalorder %s25, 1
        %s294 = scalar_select %p293, %s25, 1
        %p295 = scmp.lt.s32.totalorder %s26, 0
        %s296 = scalar_select %p295, %s26, 0
        %s297 = sadd.s32 %s296, %s294
        %s298 = smul.addr %s297, 8
        %s299 = scalar_lea.vmem %s0, %s298
        %p300 = scmp.lt.s32.totalorder %s25, 1
        %s301 = scalar_select %p300, %s25, 1
        %p302 = scmp.lt.s32.totalorder %s27, 0
        %s303 = scalar_select %p302, %s27, 0
        %s304 = sadd.s32 %s303, %s301
        %s305 = smul.addr %s304, 8
        %s306 = scalar_lea.vmem %s1, %s305
        %p307 = scmp.eq.s32.totalorder %s27, 0
        // Predicated region
        $region45: #{tpu_custom_call.1} parent=43 // pred_check
          %p308 = pneg %p307
        $region46: #{tpu_custom_call.1} parent=43 // pred_check_branch
          %310 = sbr.rel (%p308) target = $region48
        $region47: #{tpu_custom_call.1} parent=43 // pred_region
          %v311 = vld [vmem:[%s299] sm:$0xff]
          %v312 = vld [vmem:[%s2] sm:$0xff]
          %v313 = vld [vmem:[%s2 + $0x8] sm:$0xff]
          %v314 = vld [vmem:[%s2 + $0x10] sm:$0xff]
          %v315 = vld [vmem:[%s2 + $0x18] sm:$0xff]
          %v316 = vld [vmem:[%s2 + $0x20] sm:$0xff]
          %v317 = vld [vmem:[%s2 + $0x28] sm:$0xff]
          %v318 = vld [vmem:[%s2 + $0x30] sm:$0xff]
          %v319 = vld [vmem:[%s2 + $0x38] sm:$0xff]
          %v320 = vld [vmem:[%s2 + $0x40] sm:$0xff]
          %v321 = vld [vmem:[%s2 + $0x48] sm:$0xff]
          %v322 = vld [vmem:[%s2 + $0x50] sm:$0xff]
          %v323 = vld [vmem:[%s2 + $0x58] sm:$0xff]
          %v324 = vld [vmem:[%s2 + $0x60] sm:$0xff]
          %v325 = vld [vmem:[%s2 + $0x68] sm:$0xff]
          %v326 = vld [vmem:[%s2 + $0x70] sm:$0xff]
          %v327 = vld [vmem:[%s2 + $0x78] sm:$0xff]
          %328 = vmatprep.subr.mxu0 0.0
          %329 = vmatpush1.msra.mxu0 %v312
          %330 = vmatprep.subr.mxu0 0.0
          %331 = vmatpush1.msra.mxu0 %v313
          %332 = vmatprep.subr.mxu0 0.0
          %333 = vmatpush1.msra.mxu0 %v314
          %334 = vmatprep.subr.mxu0 0.0
          %335 = vmatpush1.msra.mxu0 %v315
          %336 = vmatprep.subr.mxu0 0.0
          %337 = vmatpush1.msra.mxu0 %v316
          %338 = vmatprep.subr.mxu0 0.0
          %339 = vmatpush1.msra.mxu0 %v317
          %340 = vmatprep.subr.mxu0 0.0
          %341 = vmatpush1.msra.mxu0 %v318
          %342 = vmatprep.subr.mxu0 0.0
          %343 = vmatpush1.msra.mxu0 %v319
          %344 = vmatprep.subr.mxu0 0.0
          %345 = vmatpush1.msra.mxu0 %v320
          %346 = vmatprep.subr.mxu0 0.0
          %347 = vmatpush1.msra.mxu0 %v321
          %348 = vmatprep.subr.mxu0 0.0
          %349 = vmatpush1.msra.mxu0 %v322
          %350 = vmatprep.subr.mxu0 0.0
          %351 = vmatpush1.msra.mxu0 %v323
          %352 = vmatprep.subr.mxu0 0.0
          %353 = vmatpush1.msra.mxu0 %v324
          %354 = vmatprep.subr.mxu0 0.0
          %355 = vmatpush1.msra.mxu0 %v325
          %356 = vmatprep.subr.mxu0 0.0
          %357 = vmatpush1.msra.mxu0 %v326
          %358 = vmatprep.subr.mxu0 0.0
          %359 = vmatpush1.msra.mxu0 %v327
          %360 = vmatprep.subr.mxu0 0.0
          %361 = vmatpush1.msra.mxu0 0.0
          %362 = vmatprep.subr.mxu0 0.0
          %363 = vmatpush1.msra.mxu0 0.0
          %364 = vmatprep.subr.mxu0 0.0
          %365 = vmatpush1.msra.mxu0 0.0
          %366 = vmatprep.subr.mxu0 0.0
          %367 = vmatpush1.msra.mxu0 0.0
          %368 = vmatprep.subr.mxu0 0.0
          %369 = vmatpush1.msra.mxu0 0.0
          %370 = vmatprep.subr.mxu0 0.0
          %371 = vmatpush1.msra.mxu0 0.0
          %372 = vmatprep.subr.mxu0 0.0
          %373 = vmatpush1.msra.mxu0 0.0
          %374 = vmatprep.subr.mxu0 0.0
          %375 = vmatpush1.msra.mxu0 0.0
          %376 = vmatprep.subr.mxu0 0.0
          %377 = vmatpush1.msra.mxu0 0.0
          %378 = vmatprep.subr.mxu0 0.0
          %379 = vmatpush1.msra.mxu0 0.0
          %380 = vmatprep.subr.mxu0 0.0
          %381 = vmatpush1.msra.mxu0 0.0
          %382 = vmatprep.subr.mxu0 0.0
          %383 = vmatpush1.msra.mxu0 0.0
          %384 = vmatprep.subr.mxu0 0.0
          %385 = vmatpush1.msra.mxu0 0.0
          %386 = vmatprep.subr.mxu0 0.0
          %387 = vmatpush1.msra.mxu0 0.0
          %388 = vmatprep.subr.mxu0 0.0
          %389 = vmatpush1.msra.mxu0 0.0
          %390 = vmatprep.subr.mxu0 0.0
          %391 = vmatpush1.msra.mxu0 0.0
          %392 = vmatprep.mubr.f32.mxu0 0.0
          %393 = vmatmul.mubr.f32.gmra.mrb[0].mxu0 %v311
          %v394 = vpop.f32.mrb[0].mxu0
          %v395 = vadd.f32 0.0, %v394
          %v396 = vpop.f32.mrb[0].mxu0
          %397 = vdwg.mxu0
          %399 = vrot.lane.b32.xlu0 %v395, 120
          %v400 = vpop.permute.xlu0 %399
          %402 = vrot.lane.b32.xlu0 %v395, 112
          %v403 = vpop.permute.xlu0 %402
          %405 = vrot.lane.b32.xlu0 %v395, 104
          %v406 = vpop.permute.xlu0 %405
          %v408 = vcombine.low %v395, %v403
          %v409 = vcombine.high %v395, %v403
          %v411 = vunpack.c.l.s4 1983009808
          %v412 = vunpack.c.0.s8 %v411
          %v413 = vlaneseq
          %v414 = vshrl.u32 %v413, 7
          %v415 = vsub.s32 %v412, %v414
          %v416 = vrot.slane %v408, %v415
          %v418 = vunpack.c.l.s4 1983009808
          %v419 = vunpack.c.0.s8 %v418
          %v420 = vlaneseq
          %v421 = vshrl.u32 %v420, 7
          %v422 = vsub.s32 %v419, %v421
          %v423 = vrot.slane %v409, %v422
          %v424 = vcombine.low %v400, %v406
          %v425 = vcombine.high %v400, %v406
          %v427 = vunpack.c.l.s4 1983009808
          %v428 = vunpack.c.0.s8 %v427
          %v429 = vlaneseq
          %v430 = vshrl.u32 %v429, 7
          %v431 = vsub.s32 %v428, %v430
          %v432 = vrot.slane %v424, %v431
          %v434 = vunpack.c.l.s4 1983009808
          %v435 = vunpack.c.0.s8 %v434
          %v436 = vlaneseq
          %v437 = vshrl.u32 %v436, 7
          %v438 = vsub.s32 %v435, %v437
          %v439 = vrot.slane %v425, %v438
          %v440 = vcombine.low %v416, %v432
          %v441 = vcombine.high %v416, %v432
          %v443 = vunpack.c.l.s4 1934713408
          %v444 = vunpack.c.0.s8 %v443
          %v445 = vlaneseq
          %v446 = vshrl.u32 %v445, 7
          %v447 = vsub.s32 %v444, %v446
          %v448 = vrot.slane %v440, %v447
          %v450 = vunpack.c.l.s4 1934713408
          %v451 = vunpack.c.0.s8 %v450
          %v452 = vlaneseq
          %v453 = vshrl.u32 %v452, 7
          %v454 = vsub.s32 %v451, %v453
          %v455 = vrot.slane %v441, %v454
          %v456 = vcombine.low %v423, %v439
          %v457 = vcombine.high %v423, %v439
          %v459 = vunpack.c.l.s4 1934713408
          %v460 = vunpack.c.0.s8 %v459
          %v461 = vlaneseq
          %v462 = vshrl.u32 %v461, 7
          %v463 = vsub.s32 %v460, %v462
          %v464 = vrot.slane %v456, %v463
          %v466 = vunpack.c.l.s4 1934713408
          %v467 = vunpack.c.0.s8 %v466
          %v468 = vlaneseq
          %v469 = vshrl.u32 %v468, 7
          %v470 = vsub.s32 %v467, %v469
          %v471 = vrot.slane %v457, %v470
          %v472 = vcombine.high %v448, 0.0
          %v473 = vcombine.high %v455, 0.0
          %v474 = vcombine.high %v464, 0.0
          %v475 = vcombine.high %v471, 0.0
          %v476 = vcombine.low %v448, %v455
          %v478 = vunpack.c.l.s4 1983009808
          %v479 = vunpack.c.0.s8 %v478
          %v480 = vlaneseq
          %v481 = vshrl.u32 %v480, 7
          %v482 = vsub.s32 %v479, %v481
          %v483 = vrot.slane %v476, %v482
          %v484 = vcombine.low %v472, %v473
          %v486 = vunpack.c.l.s4 1983009808
          %v487 = vunpack.c.0.s8 %v486
          %v488 = vlaneseq
          %v489 = vshrl.u32 %v488, 7
          %v490 = vsub.s32 %v487, %v489
          %v491 = vrot.slane %v484, %v490
          %v492 = vcombine.low %v464, %v471
          %v494 = vunpack.c.l.s4 1983009808
          %v495 = vunpack.c.0.s8 %v494
          %v496 = vlaneseq
          %v497 = vshrl.u32 %v496, 7
          %v498 = vsub.s32 %v495, %v497
          %v499 = vrot.slane %v492, %v498
          %v500 = vcombine.low %v474, %v475
          %v502 = vunpack.c.l.s4 1983009808
          %v503 = vunpack.c.0.s8 %v502
          %v504 = vlaneseq
          %v505 = vshrl.u32 %v504, 7
          %v506 = vsub.s32 %v503, %v505
          %v507 = vrot.slane %v500, %v506
          %v508 = vcombine.low %v483, %v491
          %v509 = vcombine.high %v483, %v491
          %v511 = vunpack.c.l.s4 1934713408
          %v512 = vunpack.c.0.s8 %v511
          %v513 = vlaneseq
          %v514 = vshrl.u32 %v513, 7
          %v515 = vsub.s32 %v512, %v514
          %v516 = vrot.slane %v508, %v515
          %v518 = vunpack.c.l.s4 1934713408
          %v519 = vunpack.c.0.s8 %v518
          %v520 = vlaneseq
          %v521 = vshrl.u32 %v520, 7
          %v522 = vsub.s32 %v519, %v521
          %v523 = vrot.slane %v509, %v522
          %v524 = vcombine.low %v499, %v507
          %v525 = vcombine.high %v499, %v507
          %v527 = vunpack.c.l.s4 1934713408
          %v528 = vunpack.c.0.s8 %v527
          %v529 = vlaneseq
          %v530 = vshrl.u32 %v529, 7
          %v531 = vsub.s32 %v528, %v530
          %v532 = vrot.slane %v524, %v531
          %v534 = vunpack.c.l.s4 1934713408
          %v535 = vunpack.c.0.s8 %v534
          %v536 = vlaneseq
          %v537 = vshrl.u32 %v536, 7
          %v538 = vsub.s32 %v535, %v537
          %v539 = vrot.slane %v525, %v538
          %v540 = vcombine.low %v516, %v532
          %v541 = vcombine.high %v516, %v532
          %v542 = vcombine.low %v523, %v539
          %v543 = vcombine.high %v523, %v539
          %vm544 = vcmask 64512
          %545 = vst.msk [vmem:[#allocation2] sm:$0xff] %vm544, %v540
          %546 = vst.msk [vmem:[#allocation2 + $0x8] sm:$0xff] %vm544, %v541
          %547 = vst.msk [vmem:[#allocation2 + $0x10] sm:$0xff] %vm544, %v542
          %548 = vst.msk [vmem:[#allocation2 + $0x18] sm:$0xff] %vm544, %v543
          %vm549 = vcmask 7168
          %550 = vst.msk [vmem:[#allocation4] sm:$0xff] %vm549, -inf
          %551 = vst.msk [vmem:[#allocation4 + $0x8] sm:$0xff] %vm549, -inf
          %552 = vst.msk [vmem:[#allocation4 + $0x10] sm:$0xff] %vm549, -inf
          %553 = vst.msk [vmem:[#allocation4 + $0x18] sm:$0xff] %vm549, -inf
          %554 = vst.msk [vmem:[#allocation5] sm:$0xff] %vm549, 0.0
          %555 = vst.msk [vmem:[#allocation5 + $0x8] sm:$0xff] %vm549, 0.0
          %556 = vst.msk [vmem:[#allocation5 + $0x10] sm:$0xff] %vm549, 0.0
          %557 = vst.msk [vmem:[#allocation5 + $0x18] sm:$0xff] %vm549, 0.0
          %558 = vst.msk [vmem:[#allocation3] sm:$0xff] %vm544, 0.0
          %559 = vst.msk [vmem:[#allocation3 + $0x8] sm:$0xff] %vm544, 0.0
          %560 = vst.msk [vmem:[#allocation3 + $0x10] sm:$0xff] %vm544, 0.0
          %561 = vst.msk [vmem:[#allocation3 + $0x18] sm:$0xff] %vm544, 0.0
        $region48: #{tpu_custom_call.1} parent=43 // pred_fallthru
          _
        %v562 = vld [vmem:[%s306] sm:$0xff]
        %v563 = vld [vmem:[%s3] sm:$0xff]
        %v564 = vld [vmem:[%s3 + $0x8] sm:$0xff]
        %v565 = vld [vmem:[%s3 + $0x10] sm:$0xff]
        %v566 = vld [vmem:[%s3 + $0x18] sm:$0xff]
        %v567 = vld [vmem:[%s3 + $0x20] sm:$0xff]
        %v568 = vld [vmem:[%s3 + $0x28] sm:$0xff]
        %v569 = vld [vmem:[%s3 + $0x30] sm:$0xff]
        %v570 = vld [vmem:[%s3 + $0x38] sm:$0xff]
        %v571 = vld [vmem:[%s3 + $0x40] sm:$0xff]
        %v572 = vld [vmem:[%s3 + $0x48] sm:$0xff]
        %v573 = vld [vmem:[%s3 + $0x50] sm:$0xff]
        %v574 = vld [vmem:[%s3 + $0x58] sm:$0xff]
        %v575 = vld [vmem:[%s3 + $0x60] sm:$0xff]
        %v576 = vld [vmem:[%s3 + $0x68] sm:$0xff]
        %v577 = vld [vmem:[%s3 + $0x70] sm:$0xff]
        %v578 = vld [vmem:[%s3 + $0x78] sm:$0xff]
        %579 = vmatprep.subr.mxu0 0.0
        %580 = vmatpush1.msra.mxu0 %v563
        %581 = vmatprep.subr.mxu0 0.0
        %582 = vmatpush1.msra.mxu0 %v564
        %583 = vmatprep.subr.mxu0 0.0
        %584 = vmatpush1.msra.mxu0 %v565
        %585 = vmatprep.subr.mxu0 0.0
        %586 = vmatpush1.msra.mxu0 %v566
        %587 = vmatprep.subr.mxu0 0.0
        %588 = vmatpush1.msra.mxu0 %v567
        %589 = vmatprep.subr.mxu0 0.0
        %590 = vmatpush1.msra.mxu0 %v568
        %591 = vmatprep.subr.mxu0 0.0
        %592 = vmatpush1.msra.mxu0 %v569
        %593 = vmatprep.subr.mxu0 0.0
        %594 = vmatpush1.msra.mxu0 %v570
        %595 = vmatprep.subr.mxu0 0.0
        %596 = vmatpush1.msra.mxu0 %v571
        %597 = vmatprep.subr.mxu0 0.0
        %598 = vmatpush1.msra.mxu0 %v572
        %599 = vmatprep.subr.mxu0 0.0
        %600 = vmatpush1.msra.mxu0 %v573
        %601 = vmatprep.subr.mxu0 0.0
        %602 = vmatpush1.msra.mxu0 %v574
        %603 = vmatprep.subr.mxu0 0.0
        %604 = vmatpush1.msra.mxu0 %v575
        %605 = vmatprep.subr.mxu0 0.0
        %606 = vmatpush1.msra.mxu0 %v576
        %607 = vmatprep.subr.mxu0 0.0
        %608 = vmatpush1.msra.mxu0 %v577
        %609 = vmatprep.subr.mxu0 0.0
        %610 = vmatpush1.msra.mxu0 %v578
        %611 = vmatprep.subr.mxu0 0.0
        %612 = vmatpush1.msra.mxu0 0.0
        %613 = vmatprep.subr.mxu0 0.0
        %614 = vmatpush1.msra.mxu0 0.0
        %615 = vmatprep.subr.mxu0 0.0
        %616 = vmatpush1.msra.mxu0 0.0
        %617 = vmatprep.subr.mxu0 0.0
        %618 = vmatpush1.msra.mxu0 0.0
        %619 = vmatprep.subr.mxu0 0.0
        %620 = vmatpush1.msra.mxu0 0.0
        %621 = vmatprep.subr.mxu0 0.0
        %622 = vmatpush1.msra.mxu0 0.0
        %623 = vmatprep.subr.mxu0 0.0
        %624 = vmatpush1.msra.mxu0 0.0
        %625 = vmatprep.subr.mxu0 0.0
        %626 = vmatpush1.msra.mxu0 0.0
        %627 = vmatprep.subr.mxu0 0.0
        %628 = vmatpush1.msra.mxu0 0.0
        %629 = vmatprep.subr.mxu0 0.0
        %630 = vmatpush1.msra.mxu0 0.0
        %631 = vmatprep.subr.mxu0 0.0
        %632 = vmatpush1.msra.mxu0 0.0
        %633 = vmatprep.subr.mxu0 0.0
        %634 = vmatpush1.msra.mxu0 0.0
        %635 = vmatprep.subr.mxu0 0.0
        %636 = vmatpush1.msra.mxu0 0.0
        %637 = vmatprep.subr.mxu0 0.0
        %638 = vmatpush1.msra.mxu0 0.0
        %639 = vmatprep.subr.mxu0 0.0
        %640 = vmatpush1.msra.mxu0 0.0
        %641 = vmatprep.subr.mxu0 0.0
        %642 = vmatpush1.msra.mxu0 0.0
        %643 = vmatprep.mubr.f32.mxu0 0.0
        %644 = vmatmul.mubr.f32.gmra.mrb[0].mxu0 %v562
        %v645 = vpop.f32.mrb[0].mxu0
        %v646 = vadd.f32 0.0, %v645
        %v647 = vpop.f32.mrb[0].mxu0
        %648 = vdwg.mxu0
        %650 = vrot.lane.b32.xlu0 %v646, 120
        %v651 = vpop.permute.xlu0 %650
        %653 = vrot.lane.b32.xlu0 %v646, 112
        %v654 = vpop.permute.xlu0 %653
        %656 = vrot.lane.b32.xlu0 %v646, 104
        %v657 = vpop.permute.xlu0 %656
        %v659 = vcombine.low %v646, %v654
        %v660 = vcombine.high %v646, %v654
        %v662 = vunpack.c.l.s4 1983009808
        %v663 = vunpack.c.0.s8 %v662
        %v664 = vlaneseq
        %v665 = vshrl.u32 %v664, 7
        %v666 = vsub.s32 %v663, %v665
        %v667 = vrot.slane %v659, %v666
        %v669 = vunpack.c.l.s4 1983009808
        %v670 = vunpack.c.0.s8 %v669
        %v671 = vlaneseq
        %v672 = vshrl.u32 %v671, 7
        %v673 = vsub.s32 %v670, %v672
        %v674 = vrot.slane %v660, %v673
        %v675 = vcombine.low %v651, %v657
        %v676 = vcombine.high %v651, %v657
        %v678 = vunpack.c.l.s4 1983009808
        %v679 = vunpack.c.0.s8 %v678
        %v680 = vlaneseq
        %v681 = vshrl.u32 %v680, 7
        %v682 = vsub.s32 %v679, %v681
        %v683 = vrot.slane %v675, %v682
        %v685 = vunpack.c.l.s4 1983009808
        %v686 = vunpack.c.0.s8 %v685
        %v687 = vlaneseq
        %v688 = vshrl.u32 %v687, 7
        %v689 = vsub.s32 %v686, %v688
        %v690 = vrot.slane %v676, %v689
        %v691 = vcombine.low %v667, %v683
        %v692 = vcombine.high %v667, %v683
        %v694 = vunpack.c.l.s4 1934713408
        %v695 = vunpack.c.0.s8 %v694
        %v696 = vlaneseq
        %v697 = vshrl.u32 %v696, 7
        %v698 = vsub.s32 %v695, %v697
        %v699 = vrot.slane %v691, %v698
        %v701 = vunpack.c.l.s4 1934713408
        %v702 = vunpack.c.0.s8 %v701
        %v703 = vlaneseq
        %v704 = vshrl.u32 %v703, 7
        %v705 = vsub.s32 %v702, %v704
        %v706 = vrot.slane %v692, %v705
        %v707 = vcombine.low %v674, %v690
        %v708 = vcombine.high %v674, %v690
        %v710 = vunpack.c.l.s4 1934713408
        %v711 = vunpack.c.0.s8 %v710
        %v712 = vlaneseq
        %v713 = vshrl.u32 %v712, 7
        %v714 = vsub.s32 %v711, %v713
        %v715 = vrot.slane %v707, %v714
        %v717 = vunpack.c.l.s4 1934713408
        %v718 = vunpack.c.0.s8 %v717
        %v719 = vlaneseq
        %v720 = vshrl.u32 %v719, 7
        %v721 = vsub.s32 %v718, %v720
        %v722 = vrot.slane %v708, %v721
        %v723 = vcombine.high %v699, 0.0
        %v724 = vcombine.high %v706, 0.0
        %v725 = vcombine.high %v715, 0.0
        %v726 = vcombine.high %v722, 0.0
        %v727 = vcombine.low %v699, %v706
        %v729 = vunpack.c.l.s4 1983009808
        %v730 = vunpack.c.0.s8 %v729
        %v731 = vlaneseq
        %v732 = vshrl.u32 %v731, 7
        %v733 = vsub.s32 %v730, %v732
        %v734 = vrot.slane %v727, %v733
        %v735 = vcombine.low %v723, %v724
        %v737 = vunpack.c.l.s4 1983009808
        %v738 = vunpack.c.0.s8 %v737
        %v739 = vlaneseq
        %v740 = vshrl.u32 %v739, 7
        %v741 = vsub.s32 %v738, %v740
        %v742 = vrot.slane %v735, %v741
        %v743 = vcombine.low %v715, %v722
        %v745 = vunpack.c.l.s4 1983009808
        %v746 = vunpack.c.0.s8 %v745
        %v747 = vlaneseq
        %v748 = vshrl.u32 %v747, 7
        %v749 = vsub.s32 %v746, %v748
        %v750 = vrot.slane %v743, %v749
        %v751 = vcombine.low %v725, %v726
        %v753 = vunpack.c.l.s4 1983009808
        %v754 = vunpack.c.0.s8 %v753
        %v755 = vlaneseq
        %v756 = vshrl.u32 %v755, 7
        %v757 = vsub.s32 %v754, %v756
        %v758 = vrot.slane %v751, %v757
        %v759 = vcombine.low %v734, %v742
        %v760 = vcombine.high %v734, %v742
        %v762 = vunpack.c.l.s4 1934713408
        %v763 = vunpack.c.0.s8 %v762
        %v764 = vlaneseq
        %v765 = vshrl.u32 %v764, 7
        %v766 = vsub.s32 %v763, %v765
        %v767 = vrot.slane %v759, %v766
        %v769 = vunpack.c.l.s4 1934713408
        %v770 = vunpack.c.0.s8 %v769
        %v771 = vlaneseq
        %v772 = vshrl.u32 %v771, 7
        %v773 = vsub.s32 %v770, %v772
        %v774 = vrot.slane %v760, %v773
        %v775 = vcombine.low %v750, %v758
        %v776 = vcombine.high %v750, %v758
        %v778 = vunpack.c.l.s4 1934713408
        %v779 = vunpack.c.0.s8 %v778
        %v780 = vlaneseq
        %v781 = vshrl.u32 %v780, 7
        %v782 = vsub.s32 %v779, %v781
        %v783 = vrot.slane %v775, %v782
        %v785 = vunpack.c.l.s4 1934713408
        %v786 = vunpack.c.0.s8 %v785
        %v787 = vlaneseq
        %v788 = vshrl.u32 %v787, 7
        %v789 = vsub.s32 %v786, %v788
        %v790 = vrot.slane %v776, %v789
        %v791 = vcombine.low %v767, %v783
        %v792 = vcombine.high %v767, %v783
        %v793 = vcombine.low %v774, %v790
        %v794 = vcombine.high %v774, %v790
        %795 = vrot.lane.b32.xlu0 %v646, 96
        %v796 = vpop.permute.xlu0 %795
        %797 = vrot.lane.b32.xlu0 %v651, 96
        %v798 = vpop.permute.xlu0 %797
        %799 = vrot.lane.b32.xlu0 %v654, 96
        %v800 = vpop.permute.xlu0 %799
        %801 = vrot.lane.b32.xlu0 %v657, 96
        %v802 = vpop.permute.xlu0 %801
        %v807 = vcombine.low %v796, %v800
        %v808 = vcombine.high %v796, %v800
        %v810 = vunpack.c.l.s4 1983009808
        %v811 = vunpack.c.0.s8 %v810
        %v812 = vlaneseq
        %v813 = vshrl.u32 %v812, 7
        %v814 = vsub.s32 %v811, %v813
        %v815 = vrot.slane %v807, %v814
        %v817 = vunpack.c.l.s4 1983009808
        %v818 = vunpack.c.0.s8 %v817
        %v819 = vlaneseq
        %v820 = vshrl.u32 %v819, 7
        %v821 = vsub.s32 %v818, %v820
        %v822 = vrot.slane %v808, %v821
        %v823 = vcombine.low %v798, %v802
        %v824 = vcombine.high %v798, %v802
        %v826 = vunpack.c.l.s4 1983009808
        %v827 = vunpack.c.0.s8 %v826
        %v828 = vlaneseq
        %v829 = vshrl.u32 %v828, 7
        %v830 = vsub.s32 %v827, %v829
        %v831 = vrot.slane %v823, %v830
        %v833 = vunpack.c.l.s4 1983009808
        %v834 = vunpack.c.0.s8 %v833
        %v835 = vlaneseq
        %v836 = vshrl.u32 %v835, 7
        %v837 = vsub.s32 %v834, %v836
        %v838 = vrot.slane %v824, %v837
        %v839 = vcombine.low %v815, %v831
        %v840 = vcombine.high %v815, %v831
        %v842 = vunpack.c.l.s4 1934713408
        %v843 = vunpack.c.0.s8 %v842
        %v844 = vlaneseq
        %v845 = vshrl.u32 %v844, 7
        %v846 = vsub.s32 %v843, %v845
        %v847 = vrot.slane %v839, %v846
        %v849 = vunpack.c.l.s4 1934713408
        %v850 = vunpack.c.0.s8 %v849
        %v851 = vlaneseq
        %v852 = vshrl.u32 %v851, 7
        %v853 = vsub.s32 %v850, %v852
        %v854 = vrot.slane %v840, %v853
        %v855 = vcombine.low %v822, %v838
        %v856 = vcombine.high %v822, %v838
        %v858 = vunpack.c.l.s4 1934713408
        %v859 = vunpack.c.0.s8 %v858
        %v860 = vlaneseq
        %v861 = vshrl.u32 %v860, 7
        %v862 = vsub.s32 %v859, %v861
        %v863 = vrot.slane %v855, %v862
        %v865 = vunpack.c.l.s4 1934713408
        %v866 = vunpack.c.0.s8 %v865
        %v867 = vlaneseq
        %v868 = vshrl.u32 %v867, 7
        %v869 = vsub.s32 %v866, %v868
        %v870 = vrot.slane %v856, %v869
        %v871 = vcombine.high %v847, 0.0
        %v872 = vcombine.high %v854, 0.0
        %v873 = vcombine.high %v863, 0.0
        %v874 = vcombine.high %v870, 0.0
        %v875 = vcombine.low %v847, %v854
        %v877 = vunpack.c.l.s4 1983009808
        %v878 = vunpack.c.0.s8 %v877
        %v879 = vlaneseq
        %v880 = vshrl.u32 %v879, 7
        %v881 = vsub.s32 %v878, %v880
        %v882 = vrot.slane %v875, %v881
        %v883 = vcombine.low %v871, %v872
        %v885 = vunpack.c.l.s4 1983009808
        %v886 = vunpack.c.0.s8 %v885
        %v887 = vlaneseq
        %v888 = vshrl.u32 %v887, 7
        %v889 = vsub.s32 %v886, %v888
        %v890 = vrot.slane %v883, %v889
        %v891 = vcombine.low %v863, %v870
        %v893 = vunpack.c.l.s4 1983009808
        %v894 = vunpack.c.0.s8 %v893
        %v895 = vlaneseq
        %v896 = vshrl.u32 %v895, 7
        %v897 = vsub.s32 %v894, %v896
        %v898 = vrot.slane %v891, %v897
        %v899 = vcombine.low %v873, %v874
        %v901 = vunpack.c.l.s4 1983009808
        %v902 = vunpack.c.0.s8 %v901
        %v903 = vlaneseq
        %v904 = vshrl.u32 %v903, 7
        %v905 = vsub.s32 %v902, %v904
        %v906 = vrot.slane %v899, %v905
        %v907 = vcombine.low %v882, %v890
        %v908 = vcombine.high %v882, %v890
        %v910 = vunpack.c.l.s4 1934713408
        %v911 = vunpack.c.0.s8 %v910
        %v912 = vlaneseq
        %v913 = vshrl.u32 %v912, 7
        %v914 = vsub.s32 %v911, %v913
        %v915 = vrot.slane %v907, %v914
        %v917 = vunpack.c.l.s4 1934713408
        %v918 = vunpack.c.0.s8 %v917
        %v919 = vlaneseq
        %v920 = vshrl.u32 %v919, 7
        %v921 = vsub.s32 %v918, %v920
        %v922 = vrot.slane %v908, %v921
        %v923 = vcombine.low %v898, %v906
        %v924 = vcombine.high %v898, %v906
        %v926 = vunpack.c.l.s4 1934713408
        %v927 = vunpack.c.0.s8 %v926
        %v928 = vlaneseq
        %v929 = vshrl.u32 %v928, 7
        %v930 = vsub.s32 %v927, %v929
        %v931 = vrot.slane %v923, %v930
        %v933 = vunpack.c.l.s4 1934713408
        %v934 = vunpack.c.0.s8 %v933
        %v935 = vlaneseq
        %v936 = vshrl.u32 %v935, 7
        %v937 = vsub.s32 %v934, %v936
        %v938 = vrot.slane %v924, %v937
        %v939 = vcombine.low %v915, %v931
        %v940 = vcombine.high %v915, %v931
        %v941 = vcombine.low %v922, %v938
        %v942 = vcombine.high %v922, %v938
        %v943 = vld [vmem:[#allocation2] sm:$0xff]
        %v944 = vld [vmem:[#allocation2 + $0x8] sm:$0xff]
        %v945 = vld [vmem:[#allocation2 + $0x10] sm:$0xff]
        %v946 = vld [vmem:[#allocation2 + $0x18] sm:$0xff]
        %vm947 = vcmask 64512
        %v949 = vsel %vm947, %v943, 0
        %v952 = vsel %vm947, %v791, 0
        %954 = vmatprep.subr.mxu0 0.0
        %955 = vmatpush1.xpose.msra.mxu0 %v952
        %956 = vmatprep.subr.mxu0 0.0
        %957 = vmatpush1.xpose.msra.mxu0 0.0
        %958 = vmatprep.subr.mxu0 0.0
        %959 = vmatpush1.xpose.msra.mxu0 0.0
        %960 = vmatprep.subr.mxu0 0.0
        %961 = vmatpush1.xpose.msra.mxu0 0.0
        %962 = vmatprep.subr.mxu0 0.0
        %963 = vmatpush1.xpose.msra.mxu0 0.0
        %964 = vmatprep.subr.mxu0 0.0
        %965 = vmatpush1.xpose.msra.mxu0 0.0
        %966 = vmatprep.subr.mxu0 0.0
        %967 = vmatpush1.xpose.msra.mxu0 0.0
        %968 = vmatprep.subr.mxu0 0.0
        %969 = vmatpush1.xpose.msra.mxu0 0.0
        %970 = vmatprep.subr.mxu0 0.0
        %971 = vmatpush1.xpose.msra.mxu0 0.0
        %972 = vmatprep.subr.mxu0 0.0
        %973 = vmatpush1.xpose.msra.mxu0 0.0
        %974 = vmatprep.subr.mxu0 0.0
        %975 = vmatpush1.xpose.msra.mxu0 0.0
        %976 = vmatprep.subr.mxu0 0.0
        %977 = vmatpush1.xpose.msra.mxu0 0.0
        %978 = vmatprep.subr.mxu0 0.0
        %979 = vmatpush1.xpose.msra.mxu0 0.0
        %980 = vmatprep.subr.mxu0 0.0
        %981 = vmatpush1.xpose.msra.mxu0 0.0
        %982 = vmatprep.subr.mxu0 0.0
        %983 = vmatpush1.xpose.msra.mxu0 0.0
        %984 = vmatprep.subr.mxu0 0.0
        %985 = vmatpush1.xpose.msra.mxu0 0.0
        %986 = vmatprep.subr.mxu0 0.0
        %987 = vmatpush1.xpose.msra.mxu0 0.0
        %988 = vmatprep.subr.mxu0 0.0
        %989 = vmatpush1.xpose.msra.mxu0 0.0
        %990 = vmatprep.subr.mxu0 0.0
        %991 = vmatpush1.xpose.msra.mxu0 0.0
        %992 = vmatprep.subr.mxu0 0.0
        %993 = vmatpush1.xpose.msra.mxu0 0.0
        %994 = vmatprep.subr.mxu0 0.0
        %995 = vmatpush1.xpose.msra.mxu0 0.0
        %996 = vmatprep.subr.mxu0 0.0
        %997 = vmatpush1.xpose.msra.mxu0 0.0
        %998 = vmatprep.subr.mxu0 0.0
        %999 = vmatpush1.xpose.msra.mxu0 0.0
        %1000 = vmatprep.subr.mxu0 0.0
        %1001 = vmatpush1.xpose.msra.mxu0 0.0
        %1002 = vmatprep.subr.mxu0 0.0
        %1003 = vmatpush1.xpose.msra.mxu0 0.0
        %1004 = vmatprep.subr.mxu0 0.0
        %1005 = vmatpush1.xpose.msra.mxu0 0.0
        %1006 = vmatprep.subr.mxu0 0.0
        %1007 = vmatpush1.xpose.msra.mxu0 0.0
        %1008 = vmatprep.subr.mxu0 0.0
        %1009 = vmatpush1.xpose.msra.mxu0 0.0
        %1010 = vmatprep.subr.mxu0 0.0
        %1011 = vmatpush1.xpose.msra.mxu0 0.0
        %1012 = vmatprep.subr.mxu0 0.0
        %1013 = vmatpush1.xpose.msra.mxu0 0.0
        %1014 = vmatprep.subr.mxu0 0.0
        %1015 = vmatpush1.xpose.msra.mxu0 0.0
        %1016 = vmatprep.subr.mxu0 0.0
        %1017 = vmatpush1.xpose.msra.mxu0 0.0
        %1018 = vmatprep.mubr.f32.mxu0 0.0
        %1019 = vmatmul.mubr.f32.gmra.mrb[0].mxu0 %v949
        %v1020 = vpop.f32.mrb[0].mxu0
        %v1021 = vadd.f32 0.0, %v1020
        %v1022 = vpop.f32.mrb[0].mxu0
        %1023 = vdwg.mxu0
        %v1025 = vsel %vm947, %v944, 0
        %v1028 = vsel %vm947, %v792, 0
        %1030 = vmatprep.subr.mxu0 0.0
        %1031 = vmatpush1.xpose.msra.mxu0 %v1028
        %1032 = vmatprep.subr.mxu0 0.0
        %1033 = vmatpush1.xpose.msra.mxu0 0.0
        %1034 = vmatprep.subr.mxu0 0.0
        %1035 = vmatpush1.xpose.msra.mxu0 0.0
        %1036 = vmatprep.subr.mxu0 0.0
        %1037 = vmatpush1.xpose.msra.mxu0 0.0
        %1038 = vmatprep.subr.mxu0 0.0
        %1039 = vmatpush1.xpose.msra.mxu0 0.0
        %1040 = vmatprep.subr.mxu0 0.0
        %1041 = vmatpush1.xpose.msra.mxu0 0.0
        %1042 = vmatprep.subr.mxu0 0.0
        %1043 = vmatpush1.xpose.msra.mxu0 0.0
        %1044 = vmatprep.subr.mxu0 0.0
        %1045 = vmatpush1.xpose.msra.mxu0 0.0
        %1046 = vmatprep.subr.mxu0 0.0
        %1047 = vmatpush1.xpose.msra.mxu0 0.0
        %1048 = vmatprep.subr.mxu0 0.0
        %1049 = vmatpush1.xpose.msra.mxu0 0.0
        %1050 = vmatprep.subr.mxu0 0.0
        %1051 = vmatpush1.xpose.msra.mxu0 0.0
        %1052 = vmatprep.subr.mxu0 0.0
        %1053 = vmatpush1.xpose.msra.mxu0 0.0
        %1054 = vmatprep.subr.mxu0 0.0
        %1055 = vmatpush1.xpose.msra.mxu0 0.0
        %1056 = vmatprep.subr.mxu0 0.0
        %1057 = vmatpush1.xpose.msra.mxu0 0.0
        %1058 = vmatprep.subr.mxu0 0.0
        %1059 = vmatpush1.xpose.msra.mxu0 0.0
        %1060 = vmatprep.subr.mxu0 0.0
        %1061 = vmatpush1.xpose.msra.mxu0 0.0
        %1062 = vmatprep.subr.mxu0 0.0
        %1063 = vmatpush1.xpose.msra.mxu0 0.0
        %1064 = vmatprep.subr.mxu0 0.0
        %1065 = vmatpush1.xpose.msra.mxu0 0.0
        %1066 = vmatprep.subr.mxu0 0.0
        %1067 = vmatpush1.xpose.msra.mxu0 0.0
        %1068 = vmatprep.subr.mxu0 0.0
        %1069 = vmatpush1.xpose.msra.mxu0 0.0
        %1070 = vmatprep.subr.mxu0 0.0
        %1071 = vmatpush1.xpose.msra.mxu0 0.0
        %1072 = vmatprep.subr.mxu0 0.0
        %1073 = vmatpush1.xpose.msra.mxu0 0.0
        %1074 = vmatprep.subr.mxu0 0.0
        %1075 = vmatpush1.xpose.msra.mxu0 0.0
        %1076 = vmatprep.subr.mxu0 0.0
        %1077 = vmatpush1.xpose.msra.mxu0 0.0
        %1078 = vmatprep.subr.mxu0 0.0
        %1079 = vmatpush1.xpose.msra.mxu0 0.0
        %1080 = vmatprep.subr.mxu0 0.0
        %1081 = vmatpush1.xpose.msra.mxu0 0.0
        %1082 = vmatprep.subr.mxu0 0.0
        %1083 = vmatpush1.xpose.msra.mxu0 0.0
        %1084 = vmatprep.subr.mxu0 0.0
        %1085 = vmatpush1.xpose.msra.mxu0 0.0
        %1086 = vmatprep.subr.mxu0 0.0
        %1087 = vmatpush1.xpose.msra.mxu0 0.0
        %1088 = vmatprep.subr.mxu0 0.0
        %1089 = vmatpush1.xpose.msra.mxu0 0.0
        %1090 = vmatprep.subr.mxu0 0.0
        %1091 = vmatpush1.xpose.msra.mxu0 0.0
        %1092 = vmatprep.subr.mxu0 0.0
        %1093 = vmatpush1.xpose.msra.mxu0 0.0
        %1094 = vmatprep.mubr.f32.mxu0 0.0
        %1095 = vmatmul.mubr.f32.gmra.mrb[0].mxu0 %v1025
        %v1096 = vpop.f32.mrb[0].mxu0
        %v1097 = vadd.f32 0.0, %v1096
        %v1098 = vpop.f32.mrb[0].mxu0
        %1099 = vdwg.mxu0
        %v1101 = vsel %vm947, %v945, 0
        %v1104 = vsel %vm947, %v793, 0
        %1106 = vmatprep.subr.mxu0 0.0
        %1107 = vmatpush1.xpose.msra.mxu0 %v1104
        %1108 = vmatprep.subr.mxu0 0.0
        %1109 = vmatpush1.xpose.msra.mxu0 0.0
        %1110 = vmatprep.subr.mxu0 0.0
        %1111 = vmatpush1.xpose.msra.mxu0 0.0
        %1112 = vmatprep.subr.mxu0 0.0
        %1113 = vmatpush1.xpose.msra.mxu0 0.0
        %1114 = vmatprep.subr.mxu0 0.0
        %1115 = vmatpush1.xpose.msra.mxu0 0.0
        %1116 = vmatprep.subr.mxu0 0.0
        %1117 = vmatpush1.xpose.msra.mxu0 0.0
        %1118 = vmatprep.subr.mxu0 0.0
        %1119 = vmatpush1.xpose.msra.mxu0 0.0
        %1120 = vmatprep.subr.mxu0 0.0
        %1121 = vmatpush1.xpose.msra.mxu0 0.0
        %1122 = vmatprep.subr.mxu0 0.0
        %1123 = vmatpush1.xpose.msra.mxu0 0.0
        %1124 = vmatprep.subr.mxu0 0.0
        %1125 = vmatpush1.xpose.msra.mxu0 0.0
        %1126 = vmatprep.subr.mxu0 0.0
        %1127 = vmatpush1.xpose.msra.mxu0 0.0
        %1128 = vmatprep.subr.mxu0 0.0
        %1129 = vmatpush1.xpose.msra.mxu0 0.0
        %1130 = vmatprep.subr.mxu0 0.0
        %1131 = vmatpush1.xpose.msra.mxu0 0.0
        %1132 = vmatprep.subr.mxu0 0.0
        %1133 = vmatpush1.xpose.msra.mxu0 0.0
        %1134 = vmatprep.subr.mxu0 0.0
        %1135 = vmatpush1.xpose.msra.mxu0 0.0
        %1136 = vmatprep.subr.mxu0 0.0
        %1137 = vmatpush1.xpose.msra.mxu0 0.0
        %1138 = vmatprep.subr.mxu0 0.0
        %1139 = vmatpush1.xpose.msra.mxu0 0.0
        %1140 = vmatprep.subr.mxu0 0.0
        %1141 = vmatpush1.xpose.msra.mxu0 0.0
        %1142 = vmatprep.subr.mxu0 0.0
        %1143 = vmatpush1.xpose.msra.mxu0 0.0
        %1144 = vmatprep.subr.mxu0 0.0
        %1145 = vmatpush1.xpose.msra.mxu0 0.0
        %1146 = vmatprep.subr.mxu0 0.0
        %1147 = vmatpush1.xpose.msra.mxu0 0.0
        %1148 = vmatprep.subr.mxu0 0.0
        %1149 = vmatpush1.xpose.msra.mxu0 0.0
        %1150 = vmatprep.subr.mxu0 0.0
        %1151 = vmatpush1.xpose.msra.mxu0 0.0
        %1152 = vmatprep.subr.mxu0 0.0
        %1153 = vmatpush1.xpose.msra.mxu0 0.0
        %1154 = vmatprep.subr.mxu0 0.0
        %1155 = vmatpush1.xpose.msra.mxu0 0.0
        %1156 = vmatprep.subr.mxu0 0.0
        %1157 = vmatpush1.xpose.msra.mxu0 0.0
        %1158 = vmatprep.subr.mxu0 0.0
        %1159 = vmatpush1.xpose.msra.mxu0 0.0
        %1160 = vmatprep.subr.mxu0 0.0
        %1161 = vmatpush1.xpose.msra.mxu0 0.0
        %1162 = vmatprep.subr.mxu0 0.0
        %1163 = vmatpush1.xpose.msra.mxu0 0.0
        %1164 = vmatprep.subr.mxu0 0.0
        %1165 = vmatpush1.xpose.msra.mxu0 0.0
        %1166 = vmatprep.subr.mxu0 0.0
        %1167 = vmatpush1.xpose.msra.mxu0 0.0
        %1168 = vmatprep.subr.mxu0 0.0
        %1169 = vmatpush1.xpose.msra.mxu0 0.0
        %1170 = vmatprep.mubr.f32.mxu0 0.0
        %1171 = vmatmul.mubr.f32.gmra.mrb[0].mxu0 %v1101
        %v1172 = vpop.f32.mrb[0].mxu0
        %v1173 = vadd.f32 0.0, %v1172
        %v1174 = vpop.f32.mrb[0].mxu0
        %1175 = vdwg.mxu0
        %v1177 = vsel %vm947, %v946, 0
        %v1180 = vsel %vm947, %v794, 0
        %1182 = vmatprep.subr.mxu0 0.0
        %1183 = vmatpush1.xpose.msra.mxu0 %v1180
        %1184 = vmatprep.subr.mxu0 0.0
        %1185 = vmatpush1.xpose.msra.mxu0 0.0
        %1186 = vmatprep.subr.mxu0 0.0
        %1187 = vmatpush1.xpose.msra.mxu0 0.0
        %1188 = vmatprep.subr.mxu0 0.0
        %1189 = vmatpush1.xpose.msra.mxu0 0.0
        %1190 = vmatprep.subr.mxu0 0.0
        %1191 = vmatpush1.xpose.msra.mxu0 0.0
        %1192 = vmatprep.subr.mxu0 0.0
        %1193 = vmatpush1.xpose.msra.mxu0 0.0
        %1194 = vmatprep.subr.mxu0 0.0
        %1195 = vmatpush1.xpose.msra.mxu0 0.0
        %1196 = vmatprep.subr.mxu0 0.0
        %1197 = vmatpush1.xpose.msra.mxu0 0.0
        %1198 = vmatprep.subr.mxu0 0.0
        %1199 = vmatpush1.xpose.msra.mxu0 0.0
        %1200 = vmatprep.subr.mxu0 0.0
        %1201 = vmatpush1.xpose.msra.mxu0 0.0
        %1202 = vmatprep.subr.mxu0 0.0
        %1203 = vmatpush1.xpose.msra.mxu0 0.0
        %1204 = vmatprep.subr.mxu0 0.0
        %1205 = vmatpush1.xpose.msra.mxu0 0.0
        %1206 = vmatprep.subr.mxu0 0.0
        %1207 = vmatpush1.xpose.msra.mxu0 0.0
        %1208 = vmatprep.subr.mxu0 0.0
        %1209 = vmatpush1.xpose.msra.mxu0 0.0
        %1210 = vmatprep.subr.mxu0 0.0
        %1211 = vmatpush1.xpose.msra.mxu0 0.0
        %1212 = vmatprep.subr.mxu0 0.0
        %1213 = vmatpush1.xpose.msra.mxu0 0.0
        %1214 = vmatprep.subr.mxu0 0.0
        %1215 = vmatpush1.xpose.msra.mxu0 0.0
        %1216 = vmatprep.subr.mxu0 0.0
        %1217 = vmatpush1.xpose.msra.mxu0 0.0
        %1218 = vmatprep.subr.mxu0 0.0
        %1219 = vmatpush1.xpose.msra.mxu0 0.0
        %1220 = vmatprep.subr.mxu0 0.0
        %1221 = vmatpush1.xpose.msra.mxu0 0.0
        %1222 = vmatprep.subr.mxu0 0.0
        %1223 = vmatpush1.xpose.msra.mxu0 0.0
        %1224 = vmatprep.subr.mxu0 0.0
        %1225 = vmatpush1.xpose.msra.mxu0 0.0
        %1226 = vmatprep.subr.mxu0 0.0
        %1227 = vmatpush1.xpose.msra.mxu0 0.0
        %1228 = vmatprep.subr.mxu0 0.0
        %1229 = vmatpush1.xpose.msra.mxu0 0.0
        %1230 = vmatprep.subr.mxu0 0.0
        %1231 = vmatpush1.xpose.msra.mxu0 0.0
        %1232 = vmatprep.subr.mxu0 0.0
        %1233 = vmatpush1.xpose.msra.mxu0 0.0
        %1234 = vmatprep.subr.mxu0 0.0
        %1235 = vmatpush1.xpose.msra.mxu0 0.0
        %1236 = vmatprep.subr.mxu0 0.0
        %1237 = vmatpush1.xpose.msra.mxu0 0.0
        %1238 = vmatprep.subr.mxu0 0.0
        %1239 = vmatpush1.xpose.msra.mxu0 0.0
        %1240 = vmatprep.subr.mxu0 0.0
        %1241 = vmatpush1.xpose.msra.mxu0 0.0
        %1242 = vmatprep.subr.mxu0 0.0
        %1243 = vmatpush1.xpose.msra.mxu0 0.0
        %1244 = vmatprep.subr.mxu0 0.0
        %1245 = vmatpush1.xpose.msra.mxu0 0.0
        %1246 = vmatprep.mubr.f32.mxu0 0.0
        %1247 = vmatmul.mubr.f32.gmra.mrb[0].mxu0 %v1177
        %v1248 = vpop.f32.mrb[0].mxu0
        %v1249 = vadd.f32 0.0, %v1248
        %v1250 = vpop.f32.mrb[0].mxu0
        %1251 = vdwg.mxu0
        %v1252 = vld [vmem:[#allocation4] sm:$0xff]
        %v1253 = vld [vmem:[#allocation4 + $0x8] sm:$0xff]
        %v1254 = vld [vmem:[#allocation4 + $0x10] sm:$0xff]
        %v1255 = vld [vmem:[#allocation4 + $0x18] sm:$0xff]
        %v1256 = vsel %vm947, %v1021, -inf
        %1257 = vmax.xlane.f32.xlu0 %v1256
        %v1258 = vpop.xlane.xlu0 %1257
        %v1259 = vsel %vm947, %v1097, -inf
        %1260 = vmax.xlane.f32.xlu0 %v1259
        %v1261 = vpop.xlane.xlu0 %1260
        %v1262 = vsel %vm947, %v1173, -inf
        %1263 = vmax.xlane.f32.xlu0 %v1262
        %v1264 = vpop.xlane.xlu0 %1263
        %v1265 = vsel %vm947, %v1249, -inf
        %1266 = vmax.xlane.f32.xlu0 %v1265
        %v1267 = vpop.xlane.xlu0 %1266
        %v1268 = vmax.f32 %v1252, %v1258
        %v1269 = vmax.f32 %v1253, %v1261
        %v1270 = vmax.f32 %v1254, %v1264
        %v1271 = vmax.f32 %v1255, %v1267
        %v1272 = vsub.f32 %v1252, %v1268
        %v1273 = vsub.f32 %v1253, %v1269
        %v1274 = vsub.f32 %v1254, %v1270
        %v1275 = vsub.f32 %v1255, %v1271
        %v1276 = vmul.f32 %v1272, 1.442695
        %v1277 = vpow.pop %v1276
        %v1278 = vmul.f32 %v1273, 1.442695
        %v1279 = vpow.pop %v1278
        %v1280 = vmul.f32 %v1274, 1.442695
        %v1281 = vpow.pop %v1280
        %v1282 = vmul.f32 %v1275, 1.442695
        %v1283 = vpow.pop %v1282
        %1285 = vset.pattern.permute.xlu0 0
        %1286 = vperm.xlu0 %1285, %v1268
        %v1287 = vpop.permute.xlu0 %1286
        %1290 = vset.pattern.permute.xlu0 0
        %1291 = vperm.xlu0 %1290, %v1269
        %v1292 = vpop.permute.xlu0 %1291
        %1295 = vset.pattern.permute.xlu0 0
        %1296 = vperm.xlu0 %1295, %v1270
        %v1297 = vpop.permute.xlu0 %1296
        %1300 = vset.pattern.permute.xlu0 0
        %1301 = vperm.xlu0 %1300, %v1271
        %v1302 = vpop.permute.xlu0 %1301
        %v1304 = vsub.f32 %v1021, %v1287
        %v1305 = vsub.f32 %v1097, %v1292
        %v1306 = vsub.f32 %v1173, %v1297
        %v1307 = vsub.f32 %v1249, %v1302
        %v1308 = vmul.f32 %v1304, 1.442695
        %v1309 = vpow.pop %v1308
        %v1310 = vmul.f32 %v1305, 1.442695
        %v1311 = vpow.pop %v1310
        %v1312 = vmul.f32 %v1306, 1.442695
        %v1313 = vpow.pop %v1312
        %v1314 = vmul.f32 %v1307, 1.442695
        %v1315 = vpow.pop %v1314
        %v1316 = vld [vmem:[#allocation5] sm:$0xff]
        %v1317 = vld [vmem:[#allocation5 + $0x8] sm:$0xff]
        %v1318 = vld [vmem:[#allocation5 + $0x10] sm:$0xff]
        %v1319 = vld [vmem:[#allocation5 + $0x18] sm:$0xff]
        %v1320 = vmul.f32 %v1277, %v1316
        %v1321 = vmul.f32 %v1279, %v1317
        %v1322 = vmul.f32 %v1281, %v1318
        %v1323 = vmul.f32 %v1283, %v1319
        %v1324 = vsel %vm947, %v1309, 0.0
        %1325 = vadd.xlane.f32.xlu0 %v1324
        %v1326 = vpop.xlane.xlu0 %1325
        %v1327 = vsel %vm947, %v1311, 0.0
        %1328 = vadd.xlane.f32.xlu0 %v1327
        %v1329 = vpop.xlane.xlu0 %1328
        %v1330 = vsel %vm947, %v1313, 0.0
        %1331 = vadd.xlane.f32.xlu0 %v1330
        %v1332 = vpop.xlane.xlu0 %1331
        %v1333 = vsel %vm947, %v1315, 0.0
        %1334 = vadd.xlane.f32.xlu0 %v1333
        %v1335 = vpop.xlane.xlu0 %1334
        %v1336 = vadd.f32 %v1320, %v1326
        %v1337 = vadd.f32 %v1321, %v1329
        %v1338 = vadd.f32 %v1322, %v1332
        %v1339 = vadd.f32 %v1323, %v1335
        %vm1340 = vcmask 7168
        %1341 = vst.msk [vmem:[#allocation5] sm:$0xff] %vm1340, %v1336
        %1342 = vst.msk [vmem:[#allocation5 + $0x8] sm:$0xff] %vm1340, %v1337
        %1343 = vst.msk [vmem:[#allocation5 + $0x10] sm:$0xff] %vm1340, %v1338
        %1344 = vst.msk [vmem:[#allocation5 + $0x18] sm:$0xff] %vm1340, %v1339
        %v1346 = vsel %vm947, %v1309, 0
        %1348 = vmatprep.subr.mxu0 0.0
        %1349 = vmatpush1.msra.mxu0 %v939
        %1350 = vmatprep.subr.mxu0 0.0
        %1351 = vmatpush1.msra.mxu0 0.0
        %1352 = vmatprep.subr.mxu0 0.0
        %1353 = vmatpush1.msra.mxu0 0.0
        %1354 = vmatprep.subr.mxu0 0.0
        %1355 = vmatpush1.msra.mxu0 0.0
        %1356 = vmatprep.subr.mxu0 0.0
        %1357 = vmatpush1.msra.mxu0 0.0
        %1358 = vmatprep.subr.mxu0 0.0
        %1359 = vmatpush1.msra.mxu0 0.0
        %1360 = vmatprep.subr.mxu0 0.0
        %1361 = vmatpush1.msra.mxu0 0.0
        %1362 = vmatprep.subr.mxu0 0.0
        %1363 = vmatpush1.msra.mxu0 0.0
        %1364 = vmatprep.subr.mxu0 0.0
        %1365 = vmatpush1.msra.mxu0 0.0
        %1366 = vmatprep.subr.mxu0 0.0
        %1367 = vmatpush1.msra.mxu0 0.0
        %1368 = vmatprep.subr.mxu0 0.0
        %1369 = vmatpush1.msra.mxu0 0.0
        %1370 = vmatprep.subr.mxu0 0.0
        %1371 = vmatpush1.msra.mxu0 0.0
        %1372 = vmatprep.subr.mxu0 0.0
        %1373 = vmatpush1.msra.mxu0 0.0
        %1374 = vmatprep.subr.mxu0 0.0
        %1375 = vmatpush1.msra.mxu0 0.0
        %1376 = vmatprep.subr.mxu0 0.0
        %1377 = vmatpush1.msra.mxu0 0.0
        %1378 = vmatprep.subr.mxu0 0.0
        %1379 = vmatpush1.msra.mxu0 0.0
        %1380 = vmatprep.subr.mxu0 0.0
        %1381 = vmatpush1.msra.mxu0 0.0
        %1382 = vmatprep.subr.mxu0 0.0
        %1383 = vmatpush1.msra.mxu0 0.0
        %1384 = vmatprep.subr.mxu0 0.0
        %1385 = vmatpush1.msra.mxu0 0.0
        %1386 = vmatprep.subr.mxu0 0.0
        %1387 = vmatpush1.msra.mxu0 0.0
        %1388 = vmatprep.subr.mxu0 0.0
        %1389 = vmatpush1.msra.mxu0 0.0
        %1390 = vmatprep.subr.mxu0 0.0
        %1391 = vmatpush1.msra.mxu0 0.0
        %1392 = vmatprep.subr.mxu0 0.0
        %1393 = vmatpush1.msra.mxu0 0.0
        %1394 = vmatprep.subr.mxu0 0.0
        %1395 = vmatpush1.msra.mxu0 0.0
        %1396 = vmatprep.subr.mxu0 0.0
        %1397 = vmatpush1.msra.mxu0 0.0
        %1398 = vmatprep.subr.mxu0 0.0
        %1399 = vmatpush1.msra.mxu0 0.0
        %1400 = vmatprep.subr.mxu0 0.0
        %1401 = vmatpush1.msra.mxu0 0.0
        %1402 = vmatprep.subr.mxu0 0.0
        %1403 = vmatpush1.msra.mxu0 0.0
        %1404 = vmatprep.subr.mxu0 0.0
        %1405 = vmatpush1.msra.mxu0 0.0
        %1406 = vmatprep.subr.mxu0 0.0
        %1407 = vmatpush1.msra.mxu0 0.0
        %1408 = vmatprep.subr.mxu0 0.0
        %1409 = vmatpush1.msra.mxu0 0.0
        %1410 = vmatprep.subr.mxu0 0.0
        %1411 = vmatpush1.msra.mxu0 0.0
        %1412 = vmatprep.mubr.f32.mxu0 0.0
        %1413 = vmatmul.mubr.f32.gmra.mrb[0].mxu0 %v1346
        %v1414 = vpop.f32.mrb[0].mxu0
        %v1415 = vadd.f32 0.0, %v1414
        %v1416 = vpop.f32.mrb[0].mxu0
        %1417 = vdwg.mxu0
        %v1419 = vsel %vm947, %v1311, 0
        %1421 = vmatprep.subr.mxu0 0.0
        %1422 = vmatpush1.msra.mxu0 %v940
        %1423 = vmatprep.subr.mxu0 0.0
        %1424 = vmatpush1.msra.mxu0 0.0
        %1425 = vmatprep.subr.mxu0 0.0
        %1426 = vmatpush1.msra.mxu0 0.0
        %1427 = vmatprep.subr.mxu0 0.0
        %1428 = vmatpush1.msra.mxu0 0.0
        %1429 = vmatprep.subr.mxu0 0.0
        %1430 = vmatpush1.msra.mxu0 0.0
        %1431 = vmatprep.subr.mxu0 0.0
        %1432 = vmatpush1.msra.mxu0 0.0
        %1433 = vmatprep.subr.mxu0 0.0
        %1434 = vmatpush1.msra.mxu0 0.0
        %1435 = vmatprep.subr.mxu0 0.0
        %1436 = vmatpush1.msra.mxu0 0.0
        %1437 = vmatprep.subr.mxu0 0.0
        %1438 = vmatpush1.msra.mxu0 0.0
        %1439 = vmatprep.subr.mxu0 0.0
        %1440 = vmatpush1.msra.mxu0 0.0
        %1441 = vmatprep.subr.mxu0 0.0
        %1442 = vmatpush1.msra.mxu0 0.0
        %1443 = vmatprep.subr.mxu0 0.0
        %1444 = vmatpush1.msra.mxu0 0.0
        %1445 = vmatprep.subr.mxu0 0.0
        %1446 = vmatpush1.msra.mxu0 0.0
        %1447 = vmatprep.subr.mxu0 0.0
        %1448 = vmatpush1.msra.mxu0 0.0
        %1449 = vmatprep.subr.mxu0 0.0
        %1450 = vmatpush1.msra.mxu0 0.0
        %1451 = vmatprep.subr.mxu0 0.0
        %1452 = vmatpush1.msra.mxu0 0.0
        %1453 = vmatprep.subr.mxu0 0.0
        %1454 = vmatpush1.msra.mxu0 0.0
        %1455 = vmatprep.subr.mxu0 0.0
        %1456 = vmatpush1.msra.mxu0 0.0
        %1457 = vmatprep.subr.mxu0 0.0
        %1458 = vmatpush1.msra.mxu0 0.0
        %1459 = vmatprep.subr.mxu0 0.0
        %1460 = vmatpush1.msra.mxu0 0.0
        %1461 = vmatprep.subr.mxu0 0.0
        %1462 = vmatpush1.msra.mxu0 0.0
        %1463 = vmatprep.subr.mxu0 0.0
        %1464 = vmatpush1.msra.mxu0 0.0
        %1465 = vmatprep.subr.mxu0 0.0
        %1466 = vmatpush1.msra.mxu0 0.0
        %1467 = vmatprep.subr.mxu0 0.0
        %1468 = vmatpush1.msra.mxu0 0.0
        %1469 = vmatprep.subr.mxu0 0.0
        %1470 = vmatpush1.msra.mxu0 0.0
        %1471 = vmatprep.subr.mxu0 0.0
        %1472 = vmatpush1.msra.mxu0 0.0
        %1473 = vmatprep.subr.mxu0 0.0
        %1474 = vmatpush1.msra.mxu0 0.0
        %1475 = vmatprep.subr.mxu0 0.0
        %1476 = vmatpush1.msra.mxu0 0.0
        %1477 = vmatprep.subr.mxu0 0.0
        %1478 = vmatpush1.msra.mxu0 0.0
        %1479 = vmatprep.subr.mxu0 0.0
        %1480 = vmatpush1.msra.mxu0 0.0
        %1481 = vmatprep.subr.mxu0 0.0
        %1482 = vmatpush1.msra.mxu0 0.0
        %1483 = vmatprep.subr.mxu0 0.0
        %1484 = vmatpush1.msra.mxu0 0.0
        %1485 = vmatprep.mubr.f32.mxu0 0.0
        %1486 = vmatmul.mubr.f32.gmra.mrb[0].mxu0 %v1419
        %v1487 = vpop.f32.mrb[0].mxu0
        %v1488 = vadd.f32 0.0, %v1487
        %v1489 = vpop.f32.mrb[0].mxu0
        %1490 = vdwg.mxu0
        %v1492 = vsel %vm947, %v1313, 0
        %1494 = vmatprep.subr.mxu0 0.0
        %1495 = vmatpush1.msra.mxu0 %v941
        %1496 = vmatprep.subr.mxu0 0.0
        %1497 = vmatpush1.msra.mxu0 0.0
        %1498 = vmatprep.subr.mxu0 0.0
        %1499 = vmatpush1.msra.mxu0 0.0
        %1500 = vmatprep.subr.mxu0 0.0
        %1501 = vmatpush1.msra.mxu0 0.0
        %1502 = vmatprep.subr.mxu0 0.0
        %1503 = vmatpush1.msra.mxu0 0.0
        %1504 = vmatprep.subr.mxu0 0.0
        %1505 = vmatpush1.msra.mxu0 0.0
        %1506 = vmatprep.subr.mxu0 0.0
        %1507 = vmatpush1.msra.mxu0 0.0
        %1508 = vmatprep.subr.mxu0 0.0
        %1509 = vmatpush1.msra.mxu0 0.0
        %1510 = vmatprep.subr.mxu0 0.0
        %1511 = vmatpush1.msra.mxu0 0.0
        %1512 = vmatprep.subr.mxu0 0.0
        %1513 = vmatpush1.msra.mxu0 0.0
        %1514 = vmatprep.subr.mxu0 0.0
        %1515 = vmatpush1.msra.mxu0 0.0
        %1516 = vmatprep.subr.mxu0 0.0
        %1517 = vmatpush1.msra.mxu0 0.0
        %1518 = vmatprep.subr.mxu0 0.0
        %1519 = vmatpush1.msra.mxu0 0.0
        %1520 = vmatprep.subr.mxu0 0.0
        %1521 = vmatpush1.msra.mxu0 0.0
        %1522 = vmatprep.subr.mxu0 0.0
        %1523 = vmatpush1.msra.mxu0 0.0
        %1524 = vmatprep.subr.mxu0 0.0
        %1525 = vmatpush1.msra.mxu0 0.0
        %1526 = vmatprep.subr.mxu0 0.0
        %1527 = vmatpush1.msra.mxu0 0.0
        %1528 = vmatprep.subr.mxu0 0.0
        %1529 = vmatpush1.msra.mxu0 0.0
        %1530 = vmatprep.subr.mxu0 0.0
        %1531 = vmatpush1.msra.mxu0 0.0
        %1532 = vmatprep.subr.mxu0 0.0
        %1533 = vmatpush1.msra.mxu0 0.0
        %1534 = vmatprep.subr.mxu0 0.0
        %1535 = vmatpush1.msra.mxu0 0.0
        %1536 = vmatprep.subr.mxu0 0.0
        %1537 = vmatpush1.msra.mxu0 0.0
        %1538 = vmatprep.subr.mxu0 0.0
        %1539 = vmatpush1.msra.mxu0 0.0
        %1540 = vmatprep.subr.mxu0 0.0
        %1541 = vmatpush1.msra.mxu0 0.0
        %1542 = vmatprep.subr.mxu0 0.0
        %1543 = vmatpush1.msra.mxu0 0.0
        %1544 = vmatprep.subr.mxu0 0.0
        %1545 = vmatpush1.msra.mxu0 0.0
        %1546 = vmatprep.subr.mxu0 0.0
        %1547 = vmatpush1.msra.mxu0 0.0
        %1548 = vmatprep.subr.mxu0 0.0
        %1549 = vmatpush1.msra.mxu0 0.0
        %1550 = vmatprep.subr.mxu0 0.0
        %1551 = vmatpush1.msra.mxu0 0.0
        %1552 = vmatprep.subr.mxu0 0.0
        %1553 = vmatpush1.msra.mxu0 0.0
        %1554 = vmatprep.subr.mxu0 0.0
        %1555 = vmatpush1.msra.mxu0 0.0
        %1556 = vmatprep.subr.mxu0 0.0
        %1557 = vmatpush1.msra.mxu0 0.0
        %1558 = vmatprep.mubr.f32.mxu0 0.0
        %1559 = vmatmul.mubr.f32.gmra.mrb[0].mxu0 %v1492
        %v1560 = vpop.f32.mrb[0].mxu0
        %v1561 = vadd.f32 0.0, %v1560
        %v1562 = vpop.f32.mrb[0].mxu0
        %1563 = vdwg.mxu0
        %v1565 = vsel %vm947, %v1315, 0
        %1567 = vmatprep.subr.mxu0 0.0
        %1568 = vmatpush1.msra.mxu0 %v942
        %1569 = vmatprep.subr.mxu0 0.0
        %1570 = vmatpush1.msra.mxu0 0.0
        %1571 = vmatprep.subr.mxu0 0.0
        %1572 = vmatpush1.msra.mxu0 0.0
        %1573 = vmatprep.subr.mxu0 0.0
        %1574 = vmatpush1.msra.mxu0 0.0
        %1575 = vmatprep.subr.mxu0 0.0
        %1576 = vmatpush1.msra.mxu0 0.0
        %1577 = vmatprep.subr.mxu0 0.0
        %1578 = vmatpush1.msra.mxu0 0.0
        %1579 = vmatprep.subr.mxu0 0.0
        %1580 = vmatpush1.msra.mxu0 0.0
        %1581 = vmatprep.subr.mxu0 0.0
        %1582 = vmatpush1.msra.mxu0 0.0
        %1583 = vmatprep.subr.mxu0 0.0
        %1584 = vmatpush1.msra.mxu0 0.0
        %1585 = vmatprep.subr.mxu0 0.0
        %1586 = vmatpush1.msra.mxu0 0.0
        %1587 = vmatprep.subr.mxu0 0.0
        %1588 = vmatpush1.msra.mxu0 0.0
        %1589 = vmatprep.subr.mxu0 0.0
        %1590 = vmatpush1.msra.mxu0 0.0
        %1591 = vmatprep.subr.mxu0 0.0
        %1592 = vmatpush1.msra.mxu0 0.0
        %1593 = vmatprep.subr.mxu0 0.0
        %1594 = vmatpush1.msra.mxu0 0.0
        %1595 = vmatprep.subr.mxu0 0.0
        %1596 = vmatpush1.msra.mxu0 0.0
        %1597 = vmatprep.subr.mxu0 0.0
        %1598 = vmatpush1.msra.mxu0 0.0
        %1599 = vmatprep.subr.mxu0 0.0
        %1600 = vmatpush1.msra.mxu0 0.0
        %1601 = vmatprep.subr.mxu0 0.0
        %1602 = vmatpush1.msra.mxu0 0.0
        %1603 = vmatprep.subr.mxu0 0.0
        %1604 = vmatpush1.msra.mxu0 0.0
        %1605 = vmatprep.subr.mxu0 0.0
        %1606 = vmatpush1.msra.mxu0 0.0
        %1607 = vmatprep.subr.mxu0 0.0
        %1608 = vmatpush1.msra.mxu0 0.0
        %1609 = vmatprep.subr.mxu0 0.0
        %1610 = vmatpush1.msra.mxu0 0.0
        %1611 = vmatprep.subr.mxu0 0.0
        %1612 = vmatpush1.msra.mxu0 0.0
        %1613 = vmatprep.subr.mxu0 0.0
        %1614 = vmatpush1.msra.mxu0 0.0
        %1615 = vmatprep.subr.mxu0 0.0
        %1616 = vmatpush1.msra.mxu0 0.0
        %1617 = vmatprep.subr.mxu0 0.0
        %1618 = vmatpush1.msra.mxu0 0.0
        %1619 = vmatprep.subr.mxu0 0.0
        %1620 = vmatpush1.msra.mxu0 0.0
        %1621 = vmatprep.subr.mxu0 0.0
        %1622 = vmatpush1.msra.mxu0 0.0
        %1623 = vmatprep.subr.mxu0 0.0
        %1624 = vmatpush1.msra.mxu0 0.0
        %1625 = vmatprep.subr.mxu0 0.0
        %1626 = vmatpush1.msra.mxu0 0.0
        %1627 = vmatprep.subr.mxu0 0.0
        %1628 = vmatpush1.msra.mxu0 0.0
        %1629 = vmatprep.subr.mxu0 0.0
        %1630 = vmatpush1.msra.mxu0 0.0
        %1631 = vmatprep.mubr.f32.mxu0 0.0
        %1632 = vmatmul.mubr.f32.gmra.mrb[0].mxu0 %v1565
        %v1633 = vpop.f32.mrb[0].mxu0
        %v1634 = vadd.f32 0.0, %v1633
        %v1635 = vpop.f32.mrb[0].mxu0
        %1636 = vdwg.mxu0
        %v1637 = vld [vmem:[#allocation3] sm:$0xff]
        %v1638 = vld [vmem:[#allocation3 + $0x8] sm:$0xff]
        %v1639 = vld [vmem:[#allocation3 + $0x10] sm:$0xff]
        %v1640 = vld [vmem:[#allocation3 + $0x18] sm:$0xff]
        %1642 = vset.pattern.permute.xlu0 0
        %1643 = vperm.xlu0 %1642, %v1277
        %v1644 = vpop.permute.xlu0 %1643
        %1647 = vset.pattern.permute.xlu0 0
        %1648 = vperm.xlu0 %1647, %v1279
        %v1649 = vpop.permute.xlu0 %1648
        %1652 = vset.pattern.permute.xlu0 0
        %1653 = vperm.xlu0 %1652, %v1281
        %v1654 = vpop.permute.xlu0 %1653
        %1657 = vset.pattern.permute.xlu0 0
        %1658 = vperm.xlu0 %1657, %v1283
        %v1659 = vpop.permute.xlu0 %1658
        %v1661 = vmul.f32 %v1644, %v1637
        %v1662 = vmul.f32 %v1649, %v1638
        %v1663 = vmul.f32 %v1654, %v1639
        %v1664 = vmul.f32 %v1659, %v1640
        %v1665 = vadd.f32 %v1661, %v1415
        %v1666 = vadd.f32 %v1662, %v1488
        %v1667 = vadd.f32 %v1663, %v1561
        %v1668 = vadd.f32 %v1664, %v1634
        %1669 = vst.msk [vmem:[#allocation3] sm:$0xff] %vm947, %v1665
        %1670 = vst.msk [vmem:[#allocation3 + $0x8] sm:$0xff] %vm947, %v1666
        %1671 = vst.msk [vmem:[#allocation3 + $0x10] sm:$0xff] %vm947, %v1667
        %1672 = vst.msk [vmem:[#allocation3 + $0x18] sm:$0xff] %vm947, %v1668
        %1673 = vst.msk [vmem:[#allocation4] sm:$0xff] %vm1340, %v1268
        %1674 = vst.msk [vmem:[#allocation4 + $0x8] sm:$0xff] %vm1340, %v1269
        %1675 = vst.msk [vmem:[#allocation4 + $0x10] sm:$0xff] %vm1340, %v1270
        %1676 = vst.msk [vmem:[#allocation4 + $0x18] sm:$0xff] %vm1340, %v1271
        // Predicated region
        $region49: #{tpu_custom_call.1} parent=43 // pred_check
          %p1677 = pneg %p307
        $region50: #{tpu_custom_call.1} parent=43 // pred_check_branch
          %1679 = sbr.rel (%p1677) target = $region52
        $region51: #{tpu_custom_call.1} parent=43 // pred_region
          %v1680 = vld [vmem:[#allocation5] sm:$0xff]
          %v1681 = vld [vmem:[#allocation5 + $0x8] sm:$0xff]
          %v1682 = vld [vmem:[#allocation5 + $0x10] sm:$0xff]
          %v1683 = vld [vmem:[#allocation5 + $0x18] sm:$0xff]
          %v1684 = vrcp.pop %v1680
          %v1685 = vrcp.pop %v1681
          %v1686 = vrcp.pop %v1682
          %v1687 = vrcp.pop %v1683
          %v1688 = vld [vmem:[#allocation3] sm:$0xff]
          %v1689 = vld [vmem:[#allocation3 + $0x8] sm:$0xff]
          %v1690 = vld [vmem:[#allocation3 + $0x10] sm:$0xff]
          %v1691 = vld [vmem:[#allocation3 + $0x18] sm:$0xff]
          %1693 = vset.pattern.permute.xlu0 0
          %1694 = vperm.xlu0 %1693, %v1684
          %v1695 = vpop.permute.xlu0 %1694
          %1698 = vset.pattern.permute.xlu0 0
          %1699 = vperm.xlu0 %1698, %v1685
          %v1700 = vpop.permute.xlu0 %1699
          %1703 = vset.pattern.permute.xlu0 0
          %1704 = vperm.xlu0 %1703, %v1686
          %v1705 = vpop.permute.xlu0 %1704
          %1708 = vset.pattern.permute.xlu0 0
          %1709 = vperm.xlu0 %1708, %v1687
          %v1710 = vpop.permute.xlu0 %1709
          %v1712 = vmul.f32 %v1688, %v1695
          %v1713 = vmul.f32 %v1689, %v1700
          %v1714 = vmul.f32 %v1690, %v1705
          %v1715 = vmul.f32 %v1691, %v1710
          %v1716 = vcombine.low %v1712, %v1714
          %v1717 = vcombine.high %v1712, %v1714
          %v1719 = vunpack.c.l.s4 1983009808
          %v1720 = vunpack.c.0.s8 %v1719
          %v1721 = vlaneseq
          %v1722 = vshrl.u32 %v1721, 7
          %v1723 = vsub.s32 %v1720, %v1722
          %v1724 = vrot.slane %v1716, %v1723
          %v1726 = vunpack.c.l.s4 1983009808
          %v1727 = vunpack.c.0.s8 %v1726
          %v1728 = vlaneseq
          %v1729 = vshrl.u32 %v1728, 7
          %v1730 = vsub.s32 %v1727, %v1729
          %v1731 = vrot.slane %v1717, %v1730
          %v1732 = vcombine.low %v1713, %v1715
          %v1733 = vcombine.high %v1713, %v1715
          %v1735 = vunpack.c.l.s4 1983009808
          %v1736 = vunpack.c.0.s8 %v1735
          %v1737 = vlaneseq
          %v1738 = vshrl.u32 %v1737, 7
          %v1739 = vsub.s32 %v1736, %v1738
          %v1740 = vrot.slane %v1732, %v1739
          %v1742 = vunpack.c.l.s4 1983009808
          %v1743 = vunpack.c.0.s8 %v1742
          %v1744 = vlaneseq
          %v1745 = vshrl.u32 %v1744, 7
          %v1746 = vsub.s32 %v1743, %v1745
          %v1747 = vrot.slane %v1733, %v1746
          %v1748 = vcombine.low %v1724, %v1740
          %v1749 = vcombine.high %v1724, %v1740
          %v1751 = vunpack.c.l.s4 1934713408
          %v1752 = vunpack.c.0.s8 %v1751
          %v1753 = vlaneseq
          %v1754 = vshrl.u32 %v1753, 7
          %v1755 = vsub.s32 %v1752, %v1754
          %v1756 = vrot.slane %v1748, %v1755
          %v1758 = vunpack.c.l.s4 1934713408
          %v1759 = vunpack.c.0.s8 %v1758
          %v1760 = vlaneseq
          %v1761 = vshrl.u32 %v1760, 7
          %v1762 = vsub.s32 %v1759, %v1761
          %v1763 = vrot.slane %v1749, %v1762
          %v1764 = vcombine.low %v1731, %v1747
          %v1765 = vcombine.high %v1731, %v1747
          %v1767 = vunpack.c.l.s4 1934713408
          %v1768 = vunpack.c.0.s8 %v1767
          %v1769 = vlaneseq
          %v1770 = vshrl.u32 %v1769, 7
          %v1771 = vsub.s32 %v1768, %v1770
          %v1772 = vrot.slane %v1764, %v1771
          %v1774 = vunpack.c.l.s4 1934713408
          %v1775 = vunpack.c.0.s8 %v1774
          %v1776 = vlaneseq
          %v1777 = vshrl.u32 %v1776, 7
          %v1778 = vsub.s32 %v1775, %v1777
          %v1779 = vrot.slane %v1765, %v1778
          %v1780 = vcombine.high %v1756, 0.0
          %v1781 = vcombine.high %v1763, 0.0
          %v1782 = vcombine.high %v1772, 0.0
          %v1783 = vcombine.high %v1779, 0.0
          %v1784 = vcombine.low %v1756, %v1763
          %v1786 = vunpack.c.l.s4 1983009808
          %v1787 = vunpack.c.0.s8 %v1786
          %v1788 = vlaneseq
          %v1789 = vshrl.u32 %v1788, 7
          %v1790 = vsub.s32 %v1787, %v1789
          %v1791 = vrot.slane %v1784, %v1790
          %v1792 = vcombine.low %v1780, %v1781
          %v1794 = vunpack.c.l.s4 1983009808
          %v1795 = vunpack.c.0.s8 %v1794
          %v1796 = vlaneseq
          %v1797 = vshrl.u32 %v1796, 7
          %v1798 = vsub.s32 %v1795, %v1797
          %v1799 = vrot.slane %v1792, %v1798
          %v1800 = vcombine.low %v1772, %v1779
          %v1802 = vunpack.c.l.s4 1983009808
          %v1803 = vunpack.c.0.s8 %v1802
          %v1804 = vlaneseq
          %v1805 = vshrl.u32 %v1804, 7
          %v1806 = vsub.s32 %v1803, %v1805
          %v1807 = vrot.slane %v1800, %v1806
          %v1808 = vcombine.low %v1782, %v1783
          %v1810 = vunpack.c.l.s4 1983009808
          %v1811 = vunpack.c.0.s8 %v1810
          %v1812 = vlaneseq
          %v1813 = vshrl.u32 %v1812, 7
          %v1814 = vsub.s32 %v1811, %v1813
          %v1815 = vrot.slane %v1808, %v1814
          %v1816 = vcombine.low %v1791, %v1799
          %v1817 = vcombine.high %v1791, %v1799
          %v1819 = vunpack.c.l.s4 1934713408
          %v1820 = vunpack.c.0.s8 %v1819
          %v1821 = vlaneseq
          %v1822 = vshrl.u32 %v1821, 7
          %v1823 = vsub.s32 %v1820, %v1822
          %v1824 = vrot.slane %v1816, %v1823
          %v1826 = vunpack.c.l.s4 1934713408
          %v1827 = vunpack.c.0.s8 %v1826
          %v1828 = vlaneseq
          %v1829 = vshrl.u32 %v1828, 7
          %v1830 = vsub.s32 %v1827, %v1829
          %v1831 = vrot.slane %v1817, %v1830
          %v1832 = vcombine.low %v1807, %v1815
          %v1833 = vcombine.high %v1807, %v1815
          %v1835 = vunpack.c.l.s4 1934713408
          %v1836 = vunpack.c.0.s8 %v1835
          %v1837 = vlaneseq
          %v1838 = vshrl.u32 %v1837, 7
          %v1839 = vsub.s32 %v1836, %v1838
          %v1840 = vrot.slane %v1832, %v1839
          %v1842 = vunpack.c.l.s4 1934713408
          %v1843 = vunpack.c.0.s8 %v1842
          %v1844 = vlaneseq
          %v1845 = vshrl.u32 %v1844, 7
          %v1846 = vsub.s32 %v1843, %v1845
          %v1847 = vrot.slane %v1833, %v1846
          %v1848 = vcombine.low %v1824, %v1840
          %v1849 = vcombine.high %v1824, %v1840
          %v1850 = vcombine.low %v1831, %v1847
          %v1851 = vcombine.high %v1831, %v1847
          %1853 = vrot.lane.b32.xlu0 %v1849, 8
          %v1854 = vpop.permute.xlu0 %1853
          %1857 = vrot.lane.b32.xlu0 %v1850, 16
          %v1858 = vpop.permute.xlu0 %1857
          %1861 = vrot.lane.b32.xlu0 %v1851, 24
          %v1862 = vpop.permute.xlu0 %1861
          %v1864 = vsel %vm947, %v1848, %v1854
          %vm1865 = vcmask 130048
          %v1866 = vsel %vm1865, %v1864, %v1858
          %vm1867 = vcmask 195584
          %v1868 = vsel %vm1867, %v1866, %v1862
          %v1869 = vld [vmem:[%s4] sm:$0xff]
          %v1870 = vld [vmem:[%s4 + $0x8] sm:$0xff]
          %v1871 = vld [vmem:[%s4 + $0x10] sm:$0xff]
          %v1872 = vld [vmem:[%s4 + $0x18] sm:$0xff]
          %v1873 = vld [vmem:[%s5] sm:$0x1]
          %v1875 = vlaneseq
          %v1876 = vshrl.u32 %v1875, 7
          %v1877 = vsub.s32 0, %v1876
          %v1878 = vrot.slane %v1873, %v1877
          %vm1880 = vcmask 261120
          %v1882 = vsel %vm1880, %v1868, 0
          %1884 = vmatprep.subr.mxu0 0.0
          %1885 = vmatpush1.msra.mxu0 %v1869
          %1886 = vmatprep.subr.mxu0 0.0
          %1887 = vmatpush1.msra.mxu0 %v1870
          %1888 = vmatprep.subr.mxu0 0.0
          %1889 = vmatpush1.msra.mxu0 %v1871
          %1890 = vmatprep.subr.mxu0 0.0
          %1891 = vmatpush1.msra.mxu0 %v1872
          %1892 = vmatprep.subr.mxu0 0.0
          %1893 = vmatpush1.msra.mxu0 0.0
          %1894 = vmatprep.subr.mxu0 0.0
          %1895 = vmatpush1.msra.mxu0 0.0
          %1896 = vmatprep.subr.mxu0 0.0
          %1897 = vmatpush1.msra.mxu0 0.0
          %1898 = vmatprep.subr.mxu0 0.0
          %1899 = vmatpush1.msra.mxu0 0.0
          %1900 = vmatprep.subr.mxu0 0.0
          %1901 = vmatpush1.msra.mxu0 0.0
          %1902 = vmatprep.subr.mxu0 0.0
          %1903 = vmatpush1.msra.mxu0 0.0
          %1904 = vmatprep.subr.mxu0 0.0
          %1905 = vmatpush1.msra.mxu0 0.0
          %1906 = vmatprep.subr.mxu0 0.0
          %1907 = vmatpush1.msra.mxu0 0.0
          %1908 = vmatprep.subr.mxu0 0.0
          %1909 = vmatpush1.msra.mxu0 0.0
          %1910 = vmatprep.subr.mxu0 0.0
          %1911 = vmatpush1.msra.mxu0 0.0
          %1912 = vmatprep.subr.mxu0 0.0
          %1913 = vmatpush1.msra.mxu0 0.0
          %1914 = vmatprep.subr.mxu0 0.0
          %1915 = vmatpush1.msra.mxu0 0.0
          %1916 = vmatprep.subr.mxu0 0.0
          %1917 = vmatpush1.msra.mxu0 0.0
          %1918 = vmatprep.subr.mxu0 0.0
          %1919 = vmatpush1.msra.mxu0 0.0
          %1920 = vmatprep.subr.mxu0 0.0
          %1921 = vmatpush1.msra.mxu0 0.0
          %1922 = vmatprep.subr.mxu0 0.0
          %1923 = vmatpush1.msra.mxu0 0.0
          %1924 = vmatprep.subr.mxu0 0.0
          %1925 = vmatpush1.msra.mxu0 0.0
          %1926 = vmatprep.subr.mxu0 0.0
          %1927 = vmatpush1.msra.mxu0 0.0
          %1928 = vmatprep.subr.mxu0 0.0
          %1929 = vmatpush1.msra.mxu0 0.0
          %1930 = vmatprep.subr.mxu0 0.0
          %1931 = vmatpush1.msra.mxu0 0.0
          %1932 = vmatprep.subr.mxu0 0.0
          %1933 = vmatpush1.msra.mxu0 0.0
          %1934 = vmatprep.subr.mxu0 0.0
          %1935 = vmatpush1.msra.mxu0 0.0
          %1936 = vmatprep.subr.mxu0 0.0
          %1937 = vmatpush1.msra.mxu0 0.0
          %1938 = vmatprep.subr.mxu0 0.0
          %1939 = vmatpush1.msra.mxu0 0.0
          %1940 = vmatprep.subr.mxu0 0.0
          %1941 = vmatpush1.msra.mxu0 0.0
          %1942 = vmatprep.subr.mxu0 0.0
          %1943 = vmatpush1.msra.mxu0 0.0
          %1944 = vmatprep.subr.mxu0 0.0
          %1945 = vmatpush1.msra.mxu0 0.0
          %1946 = vmatprep.subr.mxu0 0.0
          %1947 = vmatpush1.msra.mxu0 0.0
          %1948 = vmatprep.mubr.f32.mxu0 0.0
          %1949 = vmatmul.mubr.f32.gmra.mrb[0].mxu0 %v1882
          %v1950 = vpop.f32.mrb[0].mxu0
          %v1951 = vadd.f32 %v1878, %v1950
          %v1952 = vpop.f32.mrb[0].mxu0
          %1953 = vdwg.mxu0
          %1954 = vst [vmem:[%s292] sm:$0xff] %v1951
        $region52: #{tpu_custom_call.1} parent=43 // pred_fallthru
          _
        %s1955 = sand.u32 %s189, 1
        %s1956 = scalar_lea.sflag [#allocation7], %s1955
        %s1957 = sand.u32 %s189, 1
        %s1958 = smul.addr %s1957, 8
        %s1959 = scalar_lea.vmem [#allocation6], %s1958
        // Predicated region
        $region53: #{tpu_custom_call.1} parent=43 // pred_check
          %p1960 = pneg %p199
        $region54: #{tpu_custom_call.1} parent=43 // pred_check_branch
          %1962 = sbr.rel (%p1960) target = $region56
        $region55: #{tpu_custom_call.1} parent=43 // pred_region
          %s1964 = ssub.s32 128, 128
          %1965 = vsyncadd %s1956, %s1964
          %s1966 = sadd.s32 %s26, %s25
          %s1967 = smul.addr %s1966, 128
          %s1968 = scalar_lea.hbm %s6, %s1967
          %s1970 = sshll.u32 %s1959, 4
          %s1971 = int_to_ptr.vmem [resolvable:$true] %s1970
          %1973 = dma.vmem_to_hbm [thread:$0]  %s1971, 128, %s1968, %s1956
        $region56: #{tpu_custom_call.1} parent=43 // pred_fallthru
          _
      $region44: #{tpu_custom_call.1} parent=5 // pred_fallthru
        _
      %p1974 = scmp.le.s32.totalorder 2, %s15
      // Predicated region
      $region57: #{tpu_custom_call.1} parent=5 // pred_check
        %p1975 = pneg %p1974
      $region58: #{tpu_custom_call.1} parent=5 // pred_check_branch
        %1977 = sbr.rel (%p1975) target = $region60
      $region59: #{tpu_custom_call.1} parent=5 // pred_region
        %s1978 = ssub.s32 %s15, 2
        // Predicated region
        $region61: #{tpu_custom_call.1} parent=59 // pred_check
          %p1979 = pneg %p205
        $region62: #{tpu_custom_call.1} parent=59 // pred_check_branch
          %1981 = sbr.rel (%p1979) target = $region64
        $region63: #{tpu_custom_call.1} parent=59 // pred_region
          %s1982 = sand.u32 %s190, 1
          %s1983 = scalar_lea.sflag [#allocation7], %s1982
          %s1984 = sand.u32 %s190, 1
          %s1985 = smul.addr %s1984, 8
          %s1986 = scalar_lea.vmem [#allocation6], %s1985
          %1987 = dma.done %s1983, 128
        $region64: #{tpu_custom_call.1} parent=59 // pred_fallthru
          _
      $region60: #{tpu_custom_call.1} parent=5 // pred_fallthru
        _
    $region6: #{tpu_custom_call.1} parent=1 // loop_footer
      %s19 = sadd.s32 1, %s15
    $region7: #{tpu_custom_call.1} parent=1 // loop_footer_branch
      %14 = sbr.rel target = $region3
    $region8: #{tpu_custom_call.1} parent=1 // loop_exit
      _
    %1988 = vsyncpa [#allocation7], 1
    %s1989 = scalar_lea.sflag [#allocation7], 1
    %1990 = vsyncpa %s1989, 1

</llo_original>
